<compile_context>
chip_gen: v7x
topology: tpu7x:2x2x1
jax: 0.10.0
libtpu: 0.0.40
codegen_flags: <defaults>
</compile_context>

<pallas_src>
import jax
import jax.numpy as jnp
from jax import lax
from jax.experimental import pallas as pl
from jax.experimental.pallas import tpu as pltpu


def _round_up(x, m):
    return ((x + m - 1) // m) * m


def _dec_layer_kernel(value_ref, query_ref,
                      pxw_ref, pxb_ref, pyw_ref, pyb_ref,
                      gw_ref, gb_ref, w1_ref, b1_ref, w2_ref, b2_ref,
                      lng_ref, lnb_ref, o_ref):
    f32, bf16 = jnp.float32, jnp.bfloat16

    # ---- BaseQVLayer projections: x = value @ Wx + bx ; y = query @ Wy + by
    xproj = jnp.dot(value_ref[...].astype(bf16), pxw_ref[...],
                    preferred_element_type=f32) + pxb_ref[...]          # (Nv, E)
    yproj = jnp.dot(query_ref[...].astype(bf16), pyw_ref[...],
                    preferred_element_type=f32) + pyb_ref[...]          # (tq, E)

    # ---- graph block ----------------------------------------------------
    xb = xproj.astype(bf16)
    # s[j, i] = y_j . x_i  (== (x @ y^T)^T); contraction over the feature dim
    s = lax.dot_general(yproj.astype(bf16), xb, (((1,), (1,)), ((), ())),
                        preferred_element_type=f32)                     # (tq, Nv)
    # ||y_j||^2 per query row: natural (tq, 1) layout from a lane reduction
    drow = jnp.sum(yproj * yproj, axis=1, keepdims=True)                # (tq, 1)
    # ||x_i||^2 laid out along lanes: ones-row matmul avoids a sublane->lane
    # transpose of the (Nv, 1) reduction result.
    ones_row = jnp.ones((1, xproj.shape[1]), f32)
    dcol = lax.dot_general(ones_row, xproj * xproj, (((1,), (1,)), ((), ())),
                           preferred_element_type=f32)                  # (1, Nv)
    # A^T = 2 * s / (Drow + Dcol); reciprocal goes to the (otherwise idle) EUP
    a_t = (2.0 * s) * pl.reciprocal(drow + dcol, approx=True)           # (tq, Nv)
    gwf = jnp.dot(a_t.astype(bf16), xb, preferred_element_type=f32)     # (tq, E)
    tgt2 = jnp.maximum(
        jnp.dot(gwf.astype(bf16), gw_ref[...], preferred_element_type=f32)
        + gb_ref[...], 0.0)                                             # (tq, Eo)

    # ---- tgt = LayerNorm(query + tgt2): single-pass mean / variance ------
    # TODO(synk): dropout / dropout2 / dropout3 are identity (eval mode).
    x = query_ref[...] + tgt2
    inv_n = 1.0 / x.shape[1]
    mu = jnp.sum(x, axis=1, keepdims=True) * inv_n
    ex2 = jnp.sum(x * x, axis=1, keepdims=True) * inv_n
    tgt = (x - mu) * lax.rsqrt(ex2 - mu * mu + 1e-5) * lng_ref[...] + lnb_ref[...]

    # ---- feed-forward tail: tgt + linear2(relu(linear1(tgt))) ------------
    h = jnp.maximum(
        jnp.dot(tgt.astype(bf16), w1_ref[...], preferred_element_type=f32)
        + b1_ref[...], 0.0)
    o_ref[...] = tgt + jnp.dot(h.astype(bf16), w2_ref[...],
                               preferred_element_type=f32) + b2_ref[...]


def dec_layer_forward(params, query, value, *, tq_max=256):
    """DecLayer.forward(query, value) as one fused Pallas kernel."""
    Nq, Dq = query.shape
    Nv, Dv = value.shape
    E = params['proj_x_w'].shape[1]
    Eo = params['graph_w'].shape[1]
    assert params['proj_x_w'].shape[0] == Dv
    assert params['proj_y_w'].shape[0] == Dq
    assert Dq == Eo, "residual `query + tgt2` requires query_dim == emb_out"

    # Query-row (M) tiling: full-extent block when small, tq_max-row tiles else.
    if Nq <= tq_max:
        tq, Nqp, q_in = Nq, Nq, query
    else:
        tq = tq_max
        Nqp = _round_up(Nq, tq)
        # TODO(synk): replace this pad with a masked final tile for large,
        # non-aligned Nq (a pad costs an extra HBM round-trip of `query`).
        q_in = query if Nqp == Nq else (
            jnp.zeros((Nqp, Dq), query.dtype).at[:Nq].set(query))

    out = pl.pallas_call(
        _dec_layer_kernel,
        out_shape=jax.ShapeDtypeStruct((Nqp, Eo), jnp.float32),
        grid_spec=pltpu.PrefetchScalarGridSpec(
            num_scalar_prefetch=0,
            grid=(Nqp // tq,),
            in_specs=[
                pl.BlockSpec((Nv, Dv), lambda i: (0, 0)),    # value (resident)
                pl.BlockSpec((tq, Dq), lambda i: (i, 0)),    # query row tile
                pl.BlockSpec((Dv, E), lambda i: (0, 0)),     # proj_x W
                pl.BlockSpec((1, E), lambda i: (0, 0)),      # proj_x b
                pl.BlockSpec((Dq, E), lambda i: (0, 0)),     # proj_y W
                pl.BlockSpec((1, E), lambda i: (0, 0)),      # proj_y b
                pl.BlockSpec((E, Eo), lambda i: (0, 0)),     # graph W
                pl.BlockSpec((1, Eo), lambda i: (0, 0)),     # graph b
                pl.BlockSpec((Eo, Eo), lambda i: (0, 0)),    # linear1 W
                pl.BlockSpec((1, Eo), lambda i: (0, 0)),     # linear1 b
                pl.BlockSpec((Eo, Eo), lambda i: (0, 0)),    # linear2 W
                pl.BlockSpec((1, Eo), lambda i: (0, 0)),     # linear2 b
                pl.BlockSpec((1, Eo), lambda i: (0, 0)),     # LayerNorm gamma
                pl.BlockSpec((1, Eo), lambda i: (0, 0)),     # LayerNorm beta
            ],
            out_specs=pl.BlockSpec((tq, Eo), lambda i: (i, 0)),
        ),
        compiler_params=pltpu.CompilerParams(
            dimension_semantics=("parallel",)),
    )(value, q_in,
      params['proj_x_w'], params['proj_x_b'],
      params['proj_y_w'], params['proj_y_b'],
      params['graph_w'], params['graph_b'],
      params['lin1_w'], params['lin1_b'],
      params['lin2_w'], params['lin2_b'],
      params['ln_g'], params['ln_b'])
    return out[:Nq] if Nqp != Nq else out


# ---------------------------------------------------------------------------
# Parameters: weights stored (in_features, out_features) in bf16, biases /
# LayerNorm params as (1, N) f32 (no per-call reshapes or casts).
# ---------------------------------------------------------------------------
def init_params(key, query_dim, value_dim, emb_size, emb_out):
    ks = jax.random.split(key, 10)
    scale = 0.05

    def nrm(k, shape):
        return jax.random.normal(k, shape, dtype=jnp.float32) * scale

    return {
        # BaseQVLayer(value_dim, query_dim, emb_size, emb_out)
        'proj_x_w': nrm(ks[0], (value_dim, emb_size)).astype(jnp.bfloat16),
        'proj_x_b': nrm(ks[1], (1, emb_size)),
        'proj_y_w': nrm(ks[2], (query_dim, emb_size)).astype(jnp.bfloat16),
        'proj_y_b': nrm(ks[3], (1, emb_size)),
        'graph_w': nrm(ks[4], (emb_size, emb_out)).astype(jnp.bfloat16),
        'graph_b': nrm(ks[5], (1, emb_out)),
        # DecLayer tail
        'lin1_w': nrm(ks[6], (emb_out, emb_out)).astype(jnp.bfloat16),
        'lin1_b': nrm(ks[7], (1, emb_out)),
        'lin2_w': nrm(ks[8], (emb_out, emb_out)).astype(jnp.bfloat16),
        'lin2_b': nrm(ks[9], (1, emb_out)),
        'ln_g': jnp.ones((1, emb_out), jnp.float32),
        'ln_b': jnp.zeros((1, emb_out), jnp.float32),
    }


if __name__ == "__main__":
    key = jax.random.PRNGKey(0)
    kq, kv, kp = jax.random.split(key, 3)

    # Small, lane-aligned shapes implied by the module
    Nq, Nv = 16, 32
    query_dim = 256      # must equal emb_out for the residual `query + tgt2`
    value_dim = 384
    emb_size = 256
    emb_out = 256

    query = jax.random.normal(kq, (Nq, query_dim), dtype=jnp.float32)
    value = jax.random.normal(kv, (Nv, value_dim), dtype=jnp.float32)
    params = init_params(kp, query_dim, value_dim, emb_size, emb_out)

    fwd = jax.jit(dec_layer_forward)
    out = jax.block_until_ready(fwd(params, query, value))

    assert out.shape == (Nq, emb_out), out.shape
    assert bool(jnp.all(jnp.isfinite(out)))
    print("KERNEL_OK")
</pallas_src>

<mosaic_0001>
module attributes {stable_mosaic.version = 11 : i64} {
  func.func @_dec_layer_kernel(%arg0: i32, %arg1: memref<32x384xf32, #tpu.memory_space<vmem>>, %arg2: memref<16x256xf32, #tpu.memory_space<vmem>>, %arg3: memref<384x256xbf16, #tpu.memory_space<vmem>>, %arg4: memref<1x256xf32, #tpu.memory_space<vmem>>, %arg5: memref<256x256xbf16, #tpu.memory_space<vmem>>, %arg6: memref<1x256xf32, #tpu.memory_space<vmem>>, %arg7: memref<256x256xbf16, #tpu.memory_space<vmem>>, %arg8: memref<1x256xf32, #tpu.memory_space<vmem>>, %arg9: memref<256x256xbf16, #tpu.memory_space<vmem>>, %arg10: memref<1x256xf32, #tpu.memory_space<vmem>>, %arg11: memref<256x256xbf16, #tpu.memory_space<vmem>>, %arg12: memref<1x256xf32, #tpu.memory_space<vmem>>, %arg13: memref<1x256xf32, #tpu.memory_space<vmem>>, %arg14: memref<1x256xf32, #tpu.memory_space<vmem>>, %arg15: memref<16x256xf32, #tpu.memory_space<vmem>>) attributes {dimension_semantics = [#tpu.dimension_semantics<parallel>], iteration_bounds = array<i64: 1>, scalar_prefetch = 0 : i64, scratch_operands = 0 : i64, tpu.core_type = #tpu.core_type<tc>, window_params = [{pipeline_mode = #tpu.pipeline_mode<synchronous>, transform_indices = @transform_0, window_bounds = array<i64: 32, 384>}, {transform_indices = @transform_1, window_bounds = array<i64: 16, 256>}, {pipeline_mode = #tpu.pipeline_mode<synchronous>, transform_indices = @transform_2, window_bounds = array<i64: 384, 256>}, {pipeline_mode = #tpu.pipeline_mode<synchronous>, transform_indices = @transform_3, window_bounds = array<i64: 1, 256>}, {pipeline_mode = #tpu.pipeline_mode<synchronous>, transform_indices = @transform_4, window_bounds = array<i64: 256, 256>}, {pipeline_mode = #tpu.pipeline_mode<synchronous>, transform_indices = @transform_5, window_bounds = array<i64: 1, 256>}, {pipeline_mode = #tpu.pipeline_mode<synchronous>, transform_indices = @transform_6, window_bounds = array<i64: 256, 256>}, {pipeline_mode = #tpu.pipeline_mode<synchronous>, transform_indices = @transform_7, window_bounds = array<i64: 1, 256>}, {pipeline_mode = #tpu.pipeline_mode<synchronous>, transform_indices = @transform_8, window_bounds = array<i64: 256, 256>}, {pipeline_mode = #tpu.pipeline_mode<synchronous>, transform_indices = @transform_9, window_bounds = array<i64: 1, 256>}, {pipeline_mode = #tpu.pipeline_mode<synchronous>, transform_indices = @transform_10, window_bounds = array<i64: 256, 256>}, {pipeline_mode = #tpu.pipeline_mode<synchronous>, transform_indices = @transform_11, window_bounds = array<i64: 1, 256>}, {pipeline_mode = #tpu.pipeline_mode<synchronous>, transform_indices = @transform_12, window_bounds = array<i64: 1, 256>}, {pipeline_mode = #tpu.pipeline_mode<synchronous>, transform_indices = @transform_13, window_bounds = array<i64: 1, 256>}, {transform_indices = @transform_14, window_bounds = array<i64: 16, 256>}]} {
    %c0 = arith.constant 0 : index
    %c0_0 = arith.constant 0 : index
    %0 = vector.load %arg1[%c0, %c0_0] : memref<32x384xf32, #tpu.memory_space<vmem>>, vector<32x384xf32>
    %1 = arith.truncf %0 : vector<32x384xf32> to vector<32x384xbf16>
    %c0_1 = arith.constant 0 : index
    %c0_2 = arith.constant 0 : index
    %2 = vector.load %arg3[%c0_1, %c0_2] : memref<384x256xbf16, #tpu.memory_space<vmem>>, vector<384x256xbf16>
    %cst = arith.constant dense<0.000000e+00> : vector<32x256xf32>
    %3 = tpu.matmul %1, %2, %cst {dimension_numbers = #tpu.dot_dimension_numbers<[1], [0], [0], [1], [0, 0, 1, 1], [], []>} : vector<32x384xbf16>, vector<384x256xbf16>, vector<32x256xf32> -> vector<32x256xf32>
    %c0_3 = arith.constant 0 : index
    %c0_4 = arith.constant 0 : index
    %4 = vector.load %arg4[%c0_3, %c0_4] : memref<1x256xf32, #tpu.memory_space<vmem>>, vector<1x256xf32>
    %5 = vector.broadcast %4 : vector<1x256xf32> to vector<32x256xf32>
    %6 = arith.addf %3, %5 : vector<32x256xf32>
    %c0_5 = arith.constant 0 : index
    %c0_6 = arith.constant 0 : index
    %7 = vector.load %arg2[%c0_5, %c0_6] : memref<16x256xf32, #tpu.memory_space<vmem>>, vector<16x256xf32>
    %8 = arith.truncf %7 : vector<16x256xf32> to vector<16x256xbf16>
    %c0_7 = arith.constant 0 : index
    %c0_8 = arith.constant 0 : index
    %9 = vector.load %arg5[%c0_7, %c0_8] : memref<256x256xbf16, #tpu.memory_space<vmem>>, vector<256x256xbf16>
    %cst_9 = arith.constant dense<0.000000e+00> : vector<16x256xf32>
    %10 = tpu.matmul %8, %9, %cst_9 {dimension_numbers = #tpu.dot_dimension_numbers<[1], [0], [0], [1], [0, 0, 1, 1], [], []>} : vector<16x256xbf16>, vector<256x256xbf16>, vector<16x256xf32> -> vector<16x256xf32>
    %c0_10 = arith.constant 0 : index
    %c0_11 = arith.constant 0 : index
    %11 = vector.load %arg6[%c0_10, %c0_11] : memref<1x256xf32, #tpu.memory_space<vmem>>, vector<1x256xf32>
    %12 = vector.broadcast %11 : vector<1x256xf32> to vector<16x256xf32>
    %13 = arith.addf %10, %12 : vector<16x256xf32>
    %14 = arith.truncf %6 : vector<32x256xf32> to vector<32x256xbf16>
    %15 = arith.truncf %13 : vector<16x256xf32> to vector<16x256xbf16>
    %cst_12 = arith.constant dense<0.000000e+00> : vector<16x32xf32>
    %16 = tpu.matmul %15, %14, %cst_12 {dimension_numbers = #tpu.dot_dimension_numbers<[1], [1], [0], [0], [0, 0, 1, 0], [], []>} : vector<16x256xbf16>, vector<32x256xbf16>, vector<16x32xf32> -> vector<16x32xf32>
    %17 = arith.mulf %13, %13 : vector<16x256xf32>
    %cst_13 = arith.constant dense<0.000000e+00> : vector<16xf32>
    %18 = vector.multi_reduction <add>, %17, %cst_13 [1] : vector<16x256xf32> to vector<16xf32>
    %19 = vector.shape_cast %18 : vector<16xf32> to vector<16x1xf32>
    %cst_14 = arith.constant 1.000000e+00 : f32
    %20 = vector.broadcast %cst_14 : f32 to vector<1x256xf32>
    %21 = arith.mulf %6, %6 : vector<32x256xf32>
    %cst_15 = arith.constant dense<0.000000e+00> : vector<1x32xf32>
    %22 = tpu.matmul %20, %21, %cst_15 {dimension_numbers = #tpu.dot_dimension_numbers<[1], [1], [0], [0], [0, 0, 1, 0], [], []>} : vector<1x256xf32>, vector<32x256xf32>, vector<1x32xf32> -> vector<1x32xf32>
    %cst_16 = arith.constant 2.000000e+00 : f32
    %23 = vector.broadcast %cst_16 : f32 to vector<16x32xf32>
    %24 = arith.mulf %23, %16 : vector<16x32xf32>
    %25 = vector.broadcast %19 : vector<16x1xf32> to vector<16x32xf32>
    %26 = vector.broadcast %22 : vector<1x32xf32> to vector<16x32xf32>
    %27 = arith.addf %25, %26 : vector<16x32xf32>
    %28 = tpu.reciprocal %27 {approx = true} : vector<16x32xf32> -> vector<16x32xf32>
    %29 = arith.mulf %24, %28 : vector<16x32xf32>
    %30 = arith.truncf %29 : vector<16x32xf32> to vector<16x32xbf16>
    %cst_17 = arith.constant dense<0.000000e+00> : vector<16x256xf32>
    %31 = tpu.matmul %30, %14, %cst_17 {dimension_numbers = #tpu.dot_dimension_numbers<[1], [0], [0], [1], [0, 0, 1, 1], [], []>} : vector<16x32xbf16>, vector<32x256xbf16>, vector<16x256xf32> -> vector<16x256xf32>
    %32 = arith.truncf %31 : vector<16x256xf32> to vector<16x256xbf16>
    %c0_18 = arith.constant 0 : index
    %c0_19 = arith.constant 0 : index
    %33 = vector.load %arg7[%c0_18, %c0_19] : memref<256x256xbf16, #tpu.memory_space<vmem>>, vector<256x256xbf16>
    %cst_20 = arith.constant dense<0.000000e+00> : vector<16x256xf32>
    %34 = tpu.matmul %32, %33, %cst_20 {dimension_numbers = #tpu.dot_dimension_numbers<[1], [0], [0], [1], [0, 0, 1, 1], [], []>} : vector<16x256xbf16>, vector<256x256xbf16>, vector<16x256xf32> -> vector<16x256xf32>
    %c0_21 = arith.constant 0 : index
    %c0_22 = arith.constant 0 : index
    %35 = vector.load %arg8[%c0_21, %c0_22] : memref<1x256xf32, #tpu.memory_space<vmem>>, vector<1x256xf32>
    %36 = vector.broadcast %35 : vector<1x256xf32> to vector<16x256xf32>
    %37 = arith.addf %34, %36 : vector<16x256xf32>
    %cst_23 = arith.constant 0.000000e+00 : f32
    %38 = vector.broadcast %cst_23 : f32 to vector<16x256xf32>
    %39 = arith.maximumf %37, %38 : vector<16x256xf32>
    %c0_24 = arith.constant 0 : index
    %c0_25 = arith.constant 0 : index
    %40 = vector.load %arg2[%c0_24, %c0_25] : memref<16x256xf32, #tpu.memory_space<vmem>>, vector<16x256xf32>
    %41 = arith.addf %40, %39 : vector<16x256xf32>
    %cst_26 = arith.constant dense<0.000000e+00> : vector<16xf32>
    %42 = vector.multi_reduction <add>, %41, %cst_26 [1] : vector<16x256xf32> to vector<16xf32>
    %43 = vector.shape_cast %42 : vector<16xf32> to vector<16x1xf32>
    %cst_27 = arith.constant 3.906250e-03 : f32
    %44 = vector.broadcast %cst_27 : f32 to vector<16x1xf32>
    %45 = arith.mulf %43, %44 : vector<16x1xf32>
    %46 = arith.mulf %41, %41 : vector<16x256xf32>
    %cst_28 = arith.constant dense<0.000000e+00> : vector<16xf32>
    %47 = vector.multi_reduction <add>, %46, %cst_28 [1] : vector<16x256xf32> to vector<16xf32>
    %48 = vector.shape_cast %47 : vector<16xf32> to vector<16x1xf32>
    %cst_29 = arith.constant 3.906250e-03 : f32
    %49 = vector.broadcast %cst_29 : f32 to vector<16x1xf32>
    %50 = arith.mulf %48, %49 : vector<16x1xf32>
    %51 = vector.broadcast %45 : vector<16x1xf32> to vector<16x256xf32>
    %52 = arith.subf %41, %51 : vector<16x256xf32>
    %53 = arith.mulf %45, %45 : vector<16x1xf32>
    %54 = arith.subf %50, %53 : vector<16x1xf32>
    %cst_30 = arith.constant 9.99999974E-6 : f32
    %55 = vector.broadcast %cst_30 : f32 to vector<16x1xf32>
    %56 = arith.addf %54, %55 : vector<16x1xf32>
    %57 = math.rsqrt %56 : vector<16x1xf32>
    %58 = vector.broadcast %57 : vector<16x1xf32> to vector<16x256xf32>
    %59 = arith.mulf %52, %58 : vector<16x256xf32>
    %c0_31 = arith.constant 0 : index
    %c0_32 = arith.constant 0 : index
    %60 = vector.load %arg13[%c0_31, %c0_32] : memref<1x256xf32, #tpu.memory_space<vmem>>, vector<1x256xf32>
    %61 = vector.broadcast %60 : vector<1x256xf32> to vector<16x256xf32>
    %62 = arith.mulf %59, %61 : vector<16x256xf32>
    %c0_33 = arith.constant 0 : index
    %c0_34 = arith.constant 0 : index
    %63 = vector.load %arg14[%c0_33, %c0_34] : memref<1x256xf32, #tpu.memory_space<vmem>>, vector<1x256xf32>
    %64 = vector.broadcast %63 : vector<1x256xf32> to vector<16x256xf32>
    %65 = arith.addf %62, %64 : vector<16x256xf32>
    %66 = arith.truncf %65 : vector<16x256xf32> to vector<16x256xbf16>
    %c0_35 = arith.constant 0 : index
    %c0_36 = arith.constant 0 : index
    %67 = vector.load %arg9[%c0_35, %c0_36] : memref<256x256xbf16, #tpu.memory_space<vmem>>, vector<256x256xbf16>
    %cst_37 = arith.constant dense<0.000000e+00> : vector<16x256xf32>
    %68 = tpu.matmul %66, %67, %cst_37 {dimension_numbers = #tpu.dot_dimension_numbers<[1], [0], [0], [1], [0, 0, 1, 1], [], []>} : vector<16x256xbf16>, vector<256x256xbf16>, vector<16x256xf32> -> vector<16x256xf32>
    %c0_38 = arith.constant 0 : index
    %c0_39 = arith.constant 0 : index
    %69 = vector.load %arg10[%c0_38, %c0_39] : memref<1x256xf32, #tpu.memory_space<vmem>>, vector<1x256xf32>
    %70 = vector.broadcast %69 : vector<1x256xf32> to vector<16x256xf32>
    %71 = arith.addf %68, %70 : vector<16x256xf32>
    %cst_40 = arith.constant 0.000000e+00 : f32
    %72 = vector.broadcast %cst_40 : f32 to vector<16x256xf32>
    %73 = arith.maximumf %71, %72 : vector<16x256xf32>
    %74 = arith.truncf %73 : vector<16x256xf32> to vector<16x256xbf16>
    %c0_41 = arith.constant 0 : index
    %c0_42 = arith.constant 0 : index
    %75 = vector.load %arg11[%c0_41, %c0_42] : memref<256x256xbf16, #tpu.memory_space<vmem>>, vector<256x256xbf16>
    %cst_43 = arith.constant dense<0.000000e+00> : vector<16x256xf32>
    %76 = tpu.matmul %74, %75, %cst_43 {dimension_numbers = #tpu.dot_dimension_numbers<[1], [0], [0], [1], [0, 0, 1, 1], [], []>} : vector<16x256xbf16>, vector<256x256xbf16>, vector<16x256xf32> -> vector<16x256xf32>
    %77 = arith.addf %65, %76 : vector<16x256xf32>
    %c0_44 = arith.constant 0 : index
    %c0_45 = arith.constant 0 : index
    %78 = vector.load %arg12[%c0_44, %c0_45] : memref<1x256xf32, #tpu.memory_space<vmem>>, vector<1x256xf32>
    %79 = vector.broadcast %78 : vector<1x256xf32> to vector<16x256xf32>
    %80 = arith.addf %77, %79 : vector<16x256xf32>
    %c0_46 = arith.constant 0 : index
    %c0_47 = arith.constant 0 : index
    %81 = vector.load %arg15[%c0_46, %c0_47] : memref<16x256xf32, #tpu.memory_space<vmem>>, vector<16x256xf32>
    tpu.vector_store %arg15[%c0_46, %c0_47], %80 {strides = array<i32>} : memref<16x256xf32, #tpu.memory_space<vmem>>, vector<16x256xf32>,
    return
  }
  func.func @transform_0(%arg0: i32) -> (i32, i32) {
    %c0_i32 = arith.constant 0 : i32
    %c0_i32_0 = arith.constant 0 : i32
    %c0_i32_1 = arith.constant 0 : i32
    return %c0_i32, %c0_i32_0 : i32, i32
  }
  func.func @transform_1(%arg0: i32) -> (i32, i32) {
    %c0_i32 = arith.constant 0 : i32
    %c0_i32_0 = arith.constant 0 : i32
    return %arg0, %c0_i32 : i32, i32
  }
  func.func @transform_2(%arg0: i32) -> (i32, i32) {
    %c0_i32 = arith.constant 0 : i32
    %c0_i32_0 = arith.constant 0 : i32
    %c0_i32_1 = arith.constant 0 : i32
    return %c0_i32, %c0_i32_0 : i32, i32
  }
  func.func @transform_3(%arg0: i32) -> (i32, i32) {
    %c0_i32 = arith.constant 0 : i32
    %c0_i32_0 = arith.constant 0 : i32
    %c0_i32_1 = arith.constant 0 : i32
    return %c0_i32, %c0_i32_0 : i32, i32
  }
  func.func @transform_4(%arg0: i32) -> (i32, i32) {
    %c0_i32 = arith.constant 0 : i32
    %c0_i32_0 = arith.constant 0 : i32
    %c0_i32_1 = arith.constant 0 : i32
    return %c0_i32, %c0_i32_0 : i32, i32
  }
  func.func @transform_5(%arg0: i32) -> (i32, i32) {
    %c0_i32 = arith.constant 0 : i32
    %c0_i32_0 = arith.constant 0 : i32
    %c0_i32_1 = arith.constant 0 : i32
    return %c0_i32, %c0_i32_0 : i32, i32
  }
  func.func @transform_6(%arg0: i32) -> (i32, i32) {
    %c0_i32 = arith.constant 0 : i32
    %c0_i32_0 = arith.constant 0 : i32
    %c0_i32_1 = arith.constant 0 : i32
    return %c0_i32, %c0_i32_0 : i32, i32
  }
  func.func @transform_7(%arg0: i32) -> (i32, i32) {
    %c0_i32 = arith.constant 0 : i32
    %c0_i32_0 = arith.constant 0 : i32
    %c0_i32_1 = arith.constant 0 : i32
    return %c0_i32, %c0_i32_0 : i32, i32
  }
  func.func @transform_8(%arg0: i32) -> (i32, i32) {
    %c0_i32 = arith.constant 0 : i32
    %c0_i32_0 = arith.constant 0 : i32
    %c0_i32_1 = arith.constant 0 : i32
    return %c0_i32, %c0_i32_0 : i32, i32
  }
  func.func @transform_9(%arg0: i32) -> (i32, i32) {
    %c0_i32 = arith.constant 0 : i32
    %c0_i32_0 = arith.constant 0 : i32
    %c0_i32_1 = arith.constant 0 : i32
    return %c0_i32, %c0_i32_0 : i32, i32
  }
  func.func @transform_10(%arg0: i32) -> (i32, i32) {
    %c0_i32 = arith.constant 0 : i32
    %c0_i32_0 = arith.constant 0 : i32
    %c0_i32_1 = arith.constant 0 : i32
    return %c0_i32, %c0_i32_0 : i32, i32
  }
  func.func @transform_11(%arg0: i32) -> (i32, i32) {
    %c0_i32 = arith.constant 0 : i32
    %c0_i32_0 = arith.constant 0 : i32
    %c0_i32_1 = arith.constant 0 : i32
    return %c0_i32, %c0_i32_0 : i32, i32
  }
  func.func @transform_12(%arg0: i32) -> (i32, i32) {
    %c0_i32 = arith.constant 0 : i32
    %c0_i32_0 = arith.constant 0 : i32
    %c0_i32_1 = arith.constant 0 : i32
    return %c0_i32, %c0_i32_0 : i32, i32
  }
  func.func @transform_13(%arg0: i32) -> (i32, i32) {
    %c0_i32 = arith.constant 0 : i32
    %c0_i32_0 = arith.constant 0 : i32
    %c0_i32_1 = arith.constant 0 : i32
    return %c0_i32, %c0_i32_0 : i32, i32
  }
  func.func @transform_14(%arg0: i32) -> (i32, i32) {
    %c0_i32 = arith.constant 0 : i32
    %c0_i32_0 = arith.constant 0 : i32
    return %arg0, %c0_i32 : i32, i32
  }
}

</mosaic_0001>

<llo_original>
// kernel: dec_layer_forward.1
$region0: #{dec_layer_forward.1}
  #allocation0 [shape = 'u32[]', space=smem, size = 0x4, offset = 0x4, fixed_abs, tag = 'smem constant byte address 0x4 - core index']
  #allocation1 [shape = 'u32[144,128]{1,0:T(1,128)}', space=vmem, size = 0x12000, scoped, tag = 'internal scratch']
  %s0 = inlined_call_operand.hbm [shape: f32[32,384], index: 0, kind: input, shape index: {}]
  %s1 = inlined_call_operand.vmem [shape: f32[16,256], index: 1, kind: input, shape index: {}]
  %s2 = inlined_call_operand.hbm [shape: bf16[384,256], index: 2, kind: input, shape index: {}]
  %s3 = inlined_call_operand.vmem [shape: f32[1,256], index: 3, kind: input, shape index: {}]
  %s4 = inlined_call_operand.hbm [shape: bf16[256,256], index: 4, kind: input, shape index: {}]
  %s5 = inlined_call_operand.vmem [shape: f32[1,256], index: 5, kind: input, shape index: {}]
  %s6 = inlined_call_operand.hbm [shape: bf16[256,256], index: 6, kind: input, shape index: {}]
  %s7 = inlined_call_operand.hbm [shape: f32[1,256], index: 7, kind: input, shape index: {}]
  %s8 = inlined_call_operand.hbm [shape: bf16[256,256], index: 8, kind: input, shape index: {}]
  %s9 = inlined_call_operand.vmem [shape: f32[1,256], index: 9, kind: input, shape index: {}]
  %s10 = inlined_call_operand.hbm [shape: bf16[256,256], index: 10, kind: input, shape index: {}]
  %s11 = inlined_call_operand.vmem [shape: f32[1,256], index: 11, kind: input, shape index: {}]
  %s12 = inlined_call_operand.vmem [shape: f32[1,256], index: 12, kind: input, shape index: {}]
  %s13 = inlined_call_operand.vmem [shape: f32[1,256], index: 13, kind: input, shape index: {}]
  %s14 = inlined_call_operand.hbm [shape: f32[16,256], index: 14, kind: output, shape index: {}]
  %s15 = sld [smem:[#allocation0]]
  $region94: #{dec_layer_forward.1} parent=0
    _
  %s17 = ssub.s32 1, %s15
  %s18 = scalar_select 0, %s17, %s15
  $region1: #{dec_layer_forward.1} parent=0
    #allocation2 [shape = 'u8[49152]{0}', space=vmem, size = 0xc000, scoped, tag = 'input window, operand 0, single buffered']
    #allocation3 [shape = 's32[1]{0}', space=sflag, size = 0x4, scoped, tag = 'scoped memory for dec_layer_forward.1']
    #allocation4 [shape = 's32[1]{0}', space=sflag, size = 0x4, scoped, tag = 'scoped memory for dec_layer_forward.1']
    #allocation5 [shape = 'u8[196608]{0}', space=vmem, size = 0x30000, scoped, tag = 'input window, operand 2, single buffered']
    #allocation6 [shape = 's32[1]{0}', space=sflag, size = 0x4, scoped, tag = 'scoped memory for dec_layer_forward.1']
    #allocation7 [shape = 'u8[131072]{0}', space=vmem, size = 0x20000, scoped, tag = 'input window, operand 4, single buffered']
    #allocation8 [shape = 'u8[131072]{0}', space=vmem, size = 0x20000, scoped, tag = 'input window, operand 6, single buffered']
    #allocation9 [shape = 's32[1]{0}', space=sflag, size = 0x4, scoped, tag = 'scoped memory for dec_layer_forward.1']
    #allocation10 [shape = 'u8[1024]{0}', space=vmem, size = 0x400, scoped, tag = 'input window, operand 7, single buffered']
    #allocation11 [shape = 'u8[131072]{0}', space=vmem, size = 0x20000, scoped, tag = 'input window, operand 8, single buffered']
    #allocation12 [shape = 's32[1]{0}', space=sflag, size = 0x4, scoped, tag = 'scoped memory for dec_layer_forward.1']
    #allocation13 [shape = 'u8[131072]{0}', space=vmem, size = 0x20000, scoped, tag = 'input window, operand 10, single buffered']
    #allocation14 [shape = 'u8[16384]{0}', space=vmem, size = 0x4000, scoped, tag = 'output window, operand 0, single buffered']
    %19 = vsyncpa [#allocation3], 0
    %20 = vsyncpa [#allocation6], 0
    %21 = vsyncpa [#allocation9], 0
    %22 = vsyncpa [#allocation12], 0
    %23 = vsyncpa [#allocation4], 0
    // Predicated region
    $region2: #{dec_layer_forward.1} parent=1 // pred_check
      _
    $region3: #{dec_layer_forward.1} parent=1 // pred_check_branch
      %25 = sbr.rel (0) target = $region5
    $region4: #{dec_layer_forward.1} parent=1 // pred_region
      %s27 = ssub.s32 1536, 1536
      %28 = vsyncadd [#allocation3], %s27
      %s29 = sshll.u32 [#allocation2], 4
      %s30 = int_to_ptr.vmem [resolvable:$true] %s29
      %35 = dma.hbm_to_vmem [thread:$0]  %s0, 1536, %s30, [#allocation3], 384, 384, 24
    $region5: #{dec_layer_forward.1} parent=1 // pred_fallthru
      _
    // Predicated region
    $region6: #{dec_layer_forward.1} parent=1 // pred_check
      _
    $region7: #{dec_layer_forward.1} parent=1 // pred_check_branch
      %37 = sbr.rel (0) target = $region9
    $region8: #{dec_layer_forward.1} parent=1 // pred_region
      _
    $region9: #{dec_layer_forward.1} parent=1 // pred_fallthru
      _
    // Predicated region
    $region10: #{dec_layer_forward.1} parent=1 // pred_check
      _
    $region11: #{dec_layer_forward.1} parent=1 // pred_check_branch
      %39 = sbr.rel (0) target = $region13
    $region12: #{dec_layer_forward.1} parent=1 // pred_region
      %s41 = ssub.s32 6144, 6144
      %42 = vsyncadd [#allocation6], %s41
      %s43 = sshll.u32 [#allocation5], 4
      %s44 = int_to_ptr.vmem [resolvable:$true] %s43
      %49 = dma.hbm_to_vmem [thread:$0]  %s2, 6144, %s44, [#allocation6], 128, 128, 8
    $region13: #{dec_layer_forward.1} parent=1 // pred_fallthru
      _
    // Predicated region
    $region14: #{dec_layer_forward.1} parent=1 // pred_check
      _
    $region15: #{dec_layer_forward.1} parent=1 // pred_check_branch
      %51 = sbr.rel (0) target = $region17
    $region16: #{dec_layer_forward.1} parent=1 // pred_region
      _
    $region17: #{dec_layer_forward.1} parent=1 // pred_fallthru
      _
    // Predicated region
    $region18: #{dec_layer_forward.1} parent=1 // pred_check
      _
    $region19: #{dec_layer_forward.1} parent=1 // pred_check_branch
      %53 = sbr.rel (0) target = $region21
    $region20: #{dec_layer_forward.1} parent=1 // pred_region
      %s55 = ssub.s32 4096, 4096
      %56 = vsyncadd [#allocation6], %s55
      %s57 = sshll.u32 [#allocation7], 4
      %s58 = int_to_ptr.vmem [resolvable:$true] %s57
      %63 = dma.hbm_to_vmem [thread:$0]  %s4, 4096, %s58, [#allocation6], 128, 128, 8
    $region21: #{dec_layer_forward.1} parent=1 // pred_fallthru
      _
    // Predicated region
    $region22: #{dec_layer_forward.1} parent=1 // pred_check
      _
    $region23: #{dec_layer_forward.1} parent=1 // pred_check_branch
      %65 = sbr.rel (0) target = $region25
    $region24: #{dec_layer_forward.1} parent=1 // pred_region
      _
    $region25: #{dec_layer_forward.1} parent=1 // pred_fallthru
      _
    // Predicated region
    $region26: #{dec_layer_forward.1} parent=1 // pred_check
      _
    $region27: #{dec_layer_forward.1} parent=1 // pred_check_branch
      %67 = sbr.rel (0) target = $region29
    $region28: #{dec_layer_forward.1} parent=1 // pred_region
      %s69 = ssub.s32 4096, 4096
      %70 = vsyncadd [#allocation9], %s69
      %s71 = sshll.u32 [#allocation8], 4
      %s72 = int_to_ptr.vmem [resolvable:$true] %s71
      %77 = dma.hbm_to_vmem [thread:$0]  %s6, 4096, %s72, [#allocation9], 128, 128, 8
    $region29: #{dec_layer_forward.1} parent=1 // pred_fallthru
      _
    // Predicated region
    $region30: #{dec_layer_forward.1} parent=1 // pred_check
      _
    $region31: #{dec_layer_forward.1} parent=1 // pred_check_branch
      %79 = sbr.rel (0) target = $region33
    $region32: #{dec_layer_forward.1} parent=1 // pred_region
      %s81 = ssub.s32 32, 32
      %82 = vsyncadd [#allocation9], %s81
      %s84 = sshll.u32 [#allocation10], 4
      %s85 = int_to_ptr.vmem [resolvable:$true] %s84
      %87 = dma.hbm_to_vmem [thread:$0]  %s7, 32, %s85, [#allocation9]
    $region33: #{dec_layer_forward.1} parent=1 // pred_fallthru
      _
    // Predicated region
    $region34: #{dec_layer_forward.1} parent=1 // pred_check
      _
    $region35: #{dec_layer_forward.1} parent=1 // pred_check_branch
      %89 = sbr.rel (0) target = $region37
    $region36: #{dec_layer_forward.1} parent=1 // pred_region
      %s91 = ssub.s32 4096, 4096
      %92 = vsyncadd [#allocation12], %s91
      %s93 = sshll.u32 [#allocation11], 4
      %s94 = int_to_ptr.vmem [resolvable:$true] %s93
      %99 = dma.hbm_to_vmem [thread:$0]  %s8, 4096, %s94, [#allocation12], 128, 128, 8
    $region37: #{dec_layer_forward.1} parent=1 // pred_fallthru
      _
    // Predicated region
    $region38: #{dec_layer_forward.1} parent=1 // pred_check
      _
    $region39: #{dec_layer_forward.1} parent=1 // pred_check_branch
      %101 = sbr.rel (0) target = $region41
    $region40: #{dec_layer_forward.1} parent=1 // pred_region
      _
    $region41: #{dec_layer_forward.1} parent=1 // pred_fallthru
      _
    // Predicated region
    $region42: #{dec_layer_forward.1} parent=1 // pred_check
      _
    $region43: #{dec_layer_forward.1} parent=1 // pred_check_branch
      %103 = sbr.rel (0) target = $region45
    $region44: #{dec_layer_forward.1} parent=1 // pred_region
      %s105 = ssub.s32 4096, 4096
      %106 = vsyncadd [#allocation12], %s105
      %s107 = sshll.u32 [#allocation13], 4
      %s108 = int_to_ptr.vmem [resolvable:$true] %s107
      %113 = dma.hbm_to_vmem [thread:$0]  %s10, 4096, %s108, [#allocation12], 128, 128, 8
    $region45: #{dec_layer_forward.1} parent=1 // pred_fallthru
      _
    // Predicated region
    $region46: #{dec_layer_forward.1} parent=1 // pred_check
      _
    $region47: #{dec_layer_forward.1} parent=1 // pred_check_branch
      %115 = sbr.rel (0) target = $region49
    $region48: #{dec_layer_forward.1} parent=1 // pred_region
      _
    $region49: #{dec_layer_forward.1} parent=1 // pred_fallthru
      _
    // Predicated region
    $region50: #{dec_layer_forward.1} parent=1 // pred_check
      _
    $region51: #{dec_layer_forward.1} parent=1 // pred_check_branch
      %117 = sbr.rel (0) target = $region53
    $region52: #{dec_layer_forward.1} parent=1 // pred_region
      _
    $region53: #{dec_layer_forward.1} parent=1 // pred_fallthru
      _
    // Predicated region
    $region54: #{dec_layer_forward.1} parent=1 // pred_check
      _
    $region55: #{dec_layer_forward.1} parent=1 // pred_check_branch
      %119 = sbr.rel (0) target = $region57
    $region56: #{dec_layer_forward.1} parent=1 // pred_region
      _
    $region57: #{dec_layer_forward.1} parent=1 // pred_fallthru
      _
    // Predicated region
    $region58: #{dec_layer_forward.1} parent=1 // pred_check
      _
    $region59: #{dec_layer_forward.1} parent=1 // pred_check_branch
      %121 = sbr.rel (0) target = $region61
    $region60: #{dec_layer_forward.1} parent=1 // pred_region
      %122 = dma.done [#allocation3], 1536
    $region61: #{dec_layer_forward.1} parent=1 // pred_fallthru
      _
    // Predicated region
    $region62: #{dec_layer_forward.1} parent=1 // pred_check
      _
    $region63: #{dec_layer_forward.1} parent=1 // pred_check_branch
      %124 = sbr.rel (0) target = $region65
    $region64: #{dec_layer_forward.1} parent=1 // pred_region
      %125 = dma.done [#allocation6], 6144
    $region65: #{dec_layer_forward.1} parent=1 // pred_fallthru
      _
    // Predicated region
    $region66: #{dec_layer_forward.1} parent=1 // pred_check
      _
    $region67: #{dec_layer_forward.1} parent=1 // pred_check_branch
      %127 = sbr.rel (0) target = $region69
    $region68: #{dec_layer_forward.1} parent=1 // pred_region
      %128 = dma.done [#allocation6], 4096
    $region69: #{dec_layer_forward.1} parent=1 // pred_fallthru
      _
    // Predicated region
    $region70: #{dec_layer_forward.1} parent=1 // pred_check
      _
    $region71: #{dec_layer_forward.1} parent=1 // pred_check_branch
      %130 = sbr.rel (0) target = $region73
    $region72: #{dec_layer_forward.1} parent=1 // pred_region
      %131 = dma.done [#allocation9], 4096
    $region73: #{dec_layer_forward.1} parent=1 // pred_fallthru
      _
    // Predicated region
    $region74: #{dec_layer_forward.1} parent=1 // pred_check
      _
    $region75: #{dec_layer_forward.1} parent=1 // pred_check_branch
      %133 = sbr.rel (0) target = $region77
    $region76: #{dec_layer_forward.1} parent=1 // pred_region
      %134 = dma.done [#allocation9], 32
    $region77: #{dec_layer_forward.1} parent=1 // pred_fallthru
      _
    // Predicated region
    $region78: #{dec_layer_forward.1} parent=1 // pred_check
      _
    $region79: #{dec_layer_forward.1} parent=1 // pred_check_branch
      %136 = sbr.rel (0) target = $region81
    $region80: #{dec_layer_forward.1} parent=1 // pred_region
      %137 = dma.done [#allocation12], 4096
    $region81: #{dec_layer_forward.1} parent=1 // pred_fallthru
      _
    // Predicated region
    $region82: #{dec_layer_forward.1} parent=1 // pred_check
      _
    $region83: #{dec_layer_forward.1} parent=1 // pred_check_branch
      %139 = sbr.rel (0) target = $region85
    $region84: #{dec_layer_forward.1} parent=1 // pred_region
      %140 = dma.done [#allocation12], 4096
    $region85: #{dec_layer_forward.1} parent=1 // pred_fallthru
      _
    %v142 = vld [vmem:[#allocation2] sm:$0xff]
    %v143 = vld [vmem:[#allocation2 + $0x8] sm:$0xff]
    %v144 = vld [vmem:[#allocation2 + $0x10] sm:$0xff]
    %v145 = vld [vmem:[#allocation2 + $0x18] sm:$0xff]
    %v146 = vld [vmem:[#allocation2 + $0x20] sm:$0xff]
    %v147 = vld [vmem:[#allocation2 + $0x28] sm:$0xff]
    %v148 = vld [vmem:[#allocation2 + $0x30] sm:$0xff]
    %v149 = vld [vmem:[#allocation2 + $0x38] sm:$0xff]
    %v150 = vld [vmem:[#allocation2 + $0x40] sm:$0xff]
    %v151 = vld [vmem:[#allocation2 + $0x48] sm:$0xff]
    %v152 = vld [vmem:[#allocation2 + $0x50] sm:$0xff]
    %v153 = vld [vmem:[#allocation2 + $0x58] sm:$0xff]
    %v154 = vpack.c.bf16 %v145, %v142
    %v155 = vpack.c.bf16 %v146, %v143
    %v156 = vpack.c.bf16 %v147, %v144
    %v157 = vpack.c.bf16 %v151, %v148
    %v158 = vpack.c.bf16 %v152, %v149
    %v159 = vpack.c.bf16 %v153, %v150
    %v160 = vld [vmem:[#allocation5] sm:$0xff]
    %v161 = vld [vmem:[#allocation5 + $0x8] sm:$0xff]
    %v162 = vld [vmem:[#allocation5 + $0x10] sm:$0xff]
    %v163 = vld [vmem:[#allocation5 + $0x18] sm:$0xff]
    %v164 = vld [vmem:[#allocation5 + $0x20] sm:$0xff]
    %v165 = vld [vmem:[#allocation5 + $0x28] sm:$0xff]
    %v166 = vld [vmem:[#allocation5 + $0x30] sm:$0xff]
    %v167 = vld [vmem:[#allocation5 + $0x38] sm:$0xff]
    %v168 = vld [vmem:[#allocation5 + $0x40] sm:$0xff]
    %v169 = vld [vmem:[#allocation5 + $0x48] sm:$0xff]
    %v170 = vld [vmem:[#allocation5 + $0x50] sm:$0xff]
    %v171 = vld [vmem:[#allocation5 + $0x58] sm:$0xff]
    %v172 = vld [vmem:[#allocation5 + $0x60] sm:$0xff]
    %v173 = vld [vmem:[#allocation5 + $0x68] sm:$0xff]
    %v174 = vld [vmem:[#allocation5 + $0x70] sm:$0xff]
    %v175 = vld [vmem:[#allocation5 + $0x78] sm:$0xff]
    %v176 = vld [vmem:[#allocation5 + $0x80] sm:$0xff]
    %v177 = vld [vmem:[#allocation5 + $0x88] sm:$0xff]
    %v178 = vld [vmem:[#allocation5 + $0x90] sm:$0xff]
    %v179 = vld [vmem:[#allocation5 + $0x98] sm:$0xff]
    %v180 = vld [vmem:[#allocation5 + $0xa0] sm:$0xff]
    %v181 = vld [vmem:[#allocation5 + $0xa8] sm:$0xff]
    %v182 = vld [vmem:[#allocation5 + $0xb0] sm:$0xff]
    %v183 = vld [vmem:[#allocation5 + $0xb8] sm:$0xff]
    %v184 = vld [vmem:[#allocation5 + $0xc0] sm:$0xff]
    %v185 = vld [vmem:[#allocation5 + $0xc8] sm:$0xff]
    %v186 = vld [vmem:[#allocation5 + $0xd0] sm:$0xff]
    %v187 = vld [vmem:[#allocation5 + $0xd8] sm:$0xff]
    %v188 = vld [vmem:[#allocation5 + $0xe0] sm:$0xff]
    %v189 = vld [vmem:[#allocation5 + $0xe8] sm:$0xff]
    %v190 = vld [vmem:[#allocation5 + $0xf0] sm:$0xff]
    %v191 = vld [vmem:[#allocation5 + $0xf8] sm:$0xff]
    %v192 = vld [vmem:[#allocation5 + $0x100] sm:$0xff]
    %v193 = vld [vmem:[#allocation5 + $0x108] sm:$0xff]
    %v194 = vld [vmem:[#allocation5 + $0x110] sm:$0xff]
    %v195 = vld [vmem:[#allocation5 + $0x118] sm:$0xff]
    %v196 = vld [vmem:[#allocation5 + $0x120] sm:$0xff]
    %v197 = vld [vmem:[#allocation5 + $0x128] sm:$0xff]
    %v198 = vld [vmem:[#allocation5 + $0x130] sm:$0xff]
    %v199 = vld [vmem:[#allocation5 + $0x138] sm:$0xff]
    %v200 = vld [vmem:[#allocation5 + $0x140] sm:$0xff]
    %v201 = vld [vmem:[#allocation5 + $0x148] sm:$0xff]
    %v202 = vld [vmem:[#allocation5 + $0x150] sm:$0xff]
    %v203 = vld [vmem:[#allocation5 + $0x158] sm:$0xff]
    %v204 = vld [vmem:[#allocation5 + $0x160] sm:$0xff]
    %v205 = vld [vmem:[#allocation5 + $0x168] sm:$0xff]
    %v206 = vld [vmem:[#allocation5 + $0x170] sm:$0xff]
    %v207 = vld [vmem:[#allocation5 + $0x178] sm:$0xff]
    %v208 = vld [vmem:[%s3] sm:$0x3]
    %v210 = vlaneseq
    %v211 = vshrl.u32 %v210, 7
    %v212 = vsub.s32 0, %v211
    %v213 = vrot.slane %v208, %v212
    %v214 = vlaneseq
    %v215 = vshrl.u32 %v214, 7
    %v216 = vsub.s32 1, %v215
    %v217 = vrot.slane %v208, %v216
    %v268 = vunpack.c.l.b16 %v160
    %v269 = vunpack.c.h.b16 %v160
    %v270 = vunpack.c.l.b16 %v161
    %v271 = vunpack.c.h.b16 %v161
    %v272 = vunpack.c.l.b16 %v162
    %v273 = vunpack.c.h.b16 %v162
    %v274 = vunpack.c.l.b16 %v163
    %v275 = vunpack.c.h.b16 %v163
    %v276 = vunpack.c.l.b16 %v164
    %v277 = vunpack.c.h.b16 %v164
    %v278 = vunpack.c.l.b16 %v165
    %v279 = vunpack.c.h.b16 %v165
    %v280 = vunpack.c.l.b16 %v166
    %v281 = vunpack.c.h.b16 %v166
    %v282 = vunpack.c.l.b16 %v167
    %v283 = vunpack.c.h.b16 %v167
    %v284 = vunpack.c.l.b16 %v168
    %v285 = vunpack.c.h.b16 %v168
    %v286 = vunpack.c.l.b16 %v169
    %v287 = vunpack.c.h.b16 %v169
    %v288 = vunpack.c.l.b16 %v170
    %v289 = vunpack.c.h.b16 %v170
    %v290 = vunpack.c.l.b16 %v171
    %v291 = vunpack.c.h.b16 %v171
    %v292 = vunpack.c.l.b16 %v172
    %v293 = vunpack.c.h.b16 %v172
    %v294 = vunpack.c.l.b16 %v173
    %v295 = vunpack.c.h.b16 %v173
    %v296 = vunpack.c.l.b16 %v174
    %v297 = vunpack.c.h.b16 %v174
    %v298 = vunpack.c.l.b16 %v175
    %v299 = vunpack.c.h.b16 %v175
    %v300 = vunpack.c.l.b16 %v176
    %v301 = vunpack.c.h.b16 %v176
    %v302 = vunpack.c.l.b16 %v177
    %v303 = vunpack.c.h.b16 %v177
    %v304 = vunpack.c.l.b16 %v178
    %v305 = vunpack.c.h.b16 %v178
    %v306 = vunpack.c.l.b16 %v179
    %v307 = vunpack.c.h.b16 %v179
    %v308 = vunpack.c.l.b16 %v180
    %v309 = vunpack.c.h.b16 %v180
    %v310 = vunpack.c.l.b16 %v181
    %v311 = vunpack.c.h.b16 %v181
    %v312 = vunpack.c.l.b16 %v182
    %v313 = vunpack.c.h.b16 %v182
    %v314 = vunpack.c.l.b16 %v183
    %v315 = vunpack.c.h.b16 %v183
    %v316 = vunpack.c.l.b16 %v184
    %v317 = vunpack.c.h.b16 %v184
    %v318 = vunpack.c.l.b16 %v185
    %v319 = vunpack.c.h.b16 %v185
    %v320 = vunpack.c.l.b16 %v186
    %v321 = vunpack.c.h.b16 %v186
    %v322 = vunpack.c.l.b16 %v187
    %v323 = vunpack.c.h.b16 %v187
    %v324 = vunpack.c.l.b16 %v188
    %v325 = vunpack.c.h.b16 %v188
    %v326 = vunpack.c.l.b16 %v189
    %v327 = vunpack.c.h.b16 %v189
    %v328 = vunpack.c.l.b16 %v190
    %v329 = vunpack.c.h.b16 %v190
    %v330 = vunpack.c.l.b16 %v191
    %v331 = vunpack.c.h.b16 %v191
    %v332 = vunpack.c.l.b16 %v192
    %v333 = vunpack.c.h.b16 %v192
    %v334 = vunpack.c.l.b16 %v193
    %v335 = vunpack.c.h.b16 %v193
    %v336 = vunpack.c.l.b16 %v194
    %v337 = vunpack.c.h.b16 %v194
    %v338 = vunpack.c.l.b16 %v195
    %v339 = vunpack.c.h.b16 %v195
    %v340 = vunpack.c.l.b16 %v196
    %v341 = vunpack.c.h.b16 %v196
    %v342 = vunpack.c.l.b16 %v197
    %v343 = vunpack.c.h.b16 %v197
    %v344 = vunpack.c.l.b16 %v198
    %v345 = vunpack.c.h.b16 %v198
    %v346 = vunpack.c.l.b16 %v199
    %v347 = vunpack.c.h.b16 %v199
    %v348 = vunpack.c.l.b16 %v200
    %v349 = vunpack.c.h.b16 %v200
    %v350 = vunpack.c.l.b16 %v201
    %v351 = vunpack.c.h.b16 %v201
    %v352 = vunpack.c.l.b16 %v202
    %v353 = vunpack.c.h.b16 %v202
    %v354 = vunpack.c.l.b16 %v203
    %v355 = vunpack.c.h.b16 %v203
    %v356 = vunpack.c.l.b16 %v204
    %v357 = vunpack.c.h.b16 %v204
    %v358 = vunpack.c.l.b16 %v205
    %v359 = vunpack.c.h.b16 %v205
    %v360 = vunpack.c.l.b16 %v206
    %v361 = vunpack.c.h.b16 %v206
    %v362 = vunpack.c.l.b16 %v207
    %v363 = vunpack.c.h.b16 %v207
    %v364 = vpack.c.b16 %v270, %v268
    %v365 = vpack.c.b16 %v271, %v269
    %v366 = vpack.c.b16 %v274, %v272
    %v367 = vpack.c.b16 %v275, %v273
    %v368 = vpack.c.b16 %v278, %v276
    %v369 = vpack.c.b16 %v279, %v277
    %v370 = vpack.c.b16 %v282, %v280
    %v371 = vpack.c.b16 %v283, %v281
    %v372 = vpack.c.b16 %v286, %v284
    %v373 = vpack.c.b16 %v287, %v285
    %v374 = vpack.c.b16 %v290, %v288
    %v375 = vpack.c.b16 %v291, %v289
    %v376 = vpack.c.b16 %v294, %v292
    %v377 = vpack.c.b16 %v295, %v293
    %v378 = vpack.c.b16 %v298, %v296
    %v379 = vpack.c.b16 %v299, %v297
    %v380 = vpack.c.b16 %v302, %v300
    %v381 = vpack.c.b16 %v303, %v301
    %v382 = vpack.c.b16 %v306, %v304
    %v383 = vpack.c.b16 %v307, %v305
    %v384 = vpack.c.b16 %v310, %v308
    %v385 = vpack.c.b16 %v311, %v309
    %v386 = vpack.c.b16 %v314, %v312
    %v387 = vpack.c.b16 %v315, %v313
    %v388 = vpack.c.b16 %v318, %v316
    %v389 = vpack.c.b16 %v319, %v317
    %v390 = vpack.c.b16 %v322, %v320
    %v391 = vpack.c.b16 %v323, %v321
    %v392 = vpack.c.b16 %v326, %v324
    %v393 = vpack.c.b16 %v327, %v325
    %v394 = vpack.c.b16 %v330, %v328
    %v395 = vpack.c.b16 %v331, %v329
    %v396 = vpack.c.b16 %v334, %v332
    %v397 = vpack.c.b16 %v335, %v333
    %v398 = vpack.c.b16 %v338, %v336
    %v399 = vpack.c.b16 %v339, %v337
    %v400 = vpack.c.b16 %v342, %v340
    %v401 = vpack.c.b16 %v343, %v341
    %v402 = vpack.c.b16 %v346, %v344
    %v403 = vpack.c.b16 %v347, %v345
    %v404 = vpack.c.b16 %v350, %v348
    %v405 = vpack.c.b16 %v351, %v349
    %v406 = vpack.c.b16 %v354, %v352
    %v407 = vpack.c.b16 %v355, %v353
    %v408 = vpack.c.b16 %v358, %v356
    %v409 = vpack.c.b16 %v359, %v357
    %v410 = vpack.c.b16 %v362, %v360
    %v411 = vpack.c.b16 %v363, %v361
    %460 = vmatprep.subr.bf16.mxu0 %v365
    %461 = vmatpush1.bf16.msra.mxu0 %v364
    %462 = vmatprep.subr.bf16.mxu0 %v367
    %463 = vmatpush1.bf16.msra.mxu0 %v366
    %464 = vmatprep.subr.bf16.mxu0 %v369
    %465 = vmatpush1.bf16.msra.mxu0 %v368
    %466 = vmatprep.subr.bf16.mxu0 %v371
    %467 = vmatpush1.bf16.msra.mxu0 %v370
    %468 = vmatprep.subr.bf16.mxu0 %v373
    %469 = vmatpush1.bf16.msra.mxu0 %v372
    %470 = vmatprep.subr.bf16.mxu0 %v375
    %471 = vmatpush1.bf16.msra.mxu0 %v374
    %472 = vmatprep.subr.bf16.mxu0 %v377
    %473 = vmatpush1.bf16.msra.mxu0 %v376
    %474 = vmatprep.subr.bf16.mxu0 %v379
    %475 = vmatpush1.bf16.msra.mxu0 %v378
    %476 = vmatprep.subr.bf16.mxu0 %v381
    %477 = vmatpush1.bf16.msra.mxu0 %v380
    %478 = vmatprep.subr.bf16.mxu0 %v383
    %479 = vmatpush1.bf16.msra.mxu0 %v382
    %480 = vmatprep.subr.bf16.mxu0 %v385
    %481 = vmatpush1.bf16.msra.mxu0 %v384
    %482 = vmatprep.subr.bf16.mxu0 %v387
    %483 = vmatpush1.bf16.msra.mxu0 %v386
    %484 = vmatprep.subr.bf16.mxu0 %v389
    %485 = vmatpush1.bf16.msra.mxu0 %v388
    %486 = vmatprep.subr.bf16.mxu0 %v391
    %487 = vmatpush1.bf16.msra.mxu0 %v390
    %488 = vmatprep.subr.bf16.mxu0 %v393
    %489 = vmatpush1.bf16.msra.mxu0 %v392
    %490 = vmatprep.subr.bf16.mxu0 %v395
    %491 = vmatpush1.bf16.msra.mxu0 %v394
    %492 = vmatprep.mubr.bf16.mxu0 %v155
    %493 = vmatmul.mubr.bf16.gmra.mrb[0].mxu0 %v154
    %v494 = vpop.f32.mrb[0].mxu0
    %v495 = vadd.f32 %v213, %v494
    %v496 = vpop.f32.mrb[0].mxu0
    %v497 = vadd.f32 %v217, %v496
    %v498 = vpop.f32.mrb[0].mxu0
    %v499 = vadd.f32 %v213, %v498
    %v500 = vpop.f32.mrb[0].mxu0
    %v501 = vadd.f32 %v217, %v500
    %502 = vmatprep.mubr.bf16.mxu0 %v158
    %503 = vmatmul.mubr.bf16.gmra.mrb[0].mxu0 %v157
    %v504 = vpop.f32.mrb[0].mxu0
    %v505 = vadd.f32 %v213, %v504
    %v506 = vpop.f32.mrb[0].mxu0
    %v507 = vadd.f32 %v217, %v506
    %v508 = vpop.f32.mrb[0].mxu0
    %v509 = vadd.f32 %v213, %v508
    %v510 = vpop.f32.mrb[0].mxu0
    %v511 = vadd.f32 %v217, %v510
    %512 = vdwg.mxu0
    %513 = vmatprep.subr.bf16.mxu0 %v397
    %514 = vmatpush1.bf16.msra.mxu0 %v396
    %515 = vmatprep.subr.bf16.mxu0 %v399
    %516 = vmatpush1.bf16.msra.mxu0 %v398
    %517 = vmatprep.subr.bf16.mxu0 %v401
    %518 = vmatpush1.bf16.msra.mxu0 %v400
    %519 = vmatprep.subr.bf16.mxu0 %v403
    %520 = vmatpush1.bf16.msra.mxu0 %v402
    %521 = vmatprep.subr.bf16.mxu0 %v405
    %522 = vmatpush1.bf16.msra.mxu0 %v404
    %523 = vmatprep.subr.bf16.mxu0 %v407
    %524 = vmatpush1.bf16.msra.mxu0 %v406
    %525 = vmatprep.subr.bf16.mxu0 %v409
    %526 = vmatpush1.bf16.msra.mxu0 %v408
    %527 = vmatprep.subr.bf16.mxu0 %v411
    %528 = vmatpush1.bf16.msra.mxu0 %v410
    %529 = vmatprep.subr.bf16.mxu0 0
    %530 = vmatpush1.bf16.msra.mxu0 0
    %531 = vmatprep.subr.bf16.mxu0 0
    %532 = vmatpush1.bf16.msra.mxu0 0
    %533 = vmatprep.subr.bf16.mxu0 0
    %534 = vmatpush1.bf16.msra.mxu0 0
    %535 = vmatprep.subr.bf16.mxu0 0
    %536 = vmatpush1.bf16.msra.mxu0 0
    %537 = vmatprep.subr.bf16.mxu0 0
    %538 = vmatpush1.bf16.msra.mxu0 0
    %539 = vmatprep.subr.bf16.mxu0 0
    %540 = vmatpush1.bf16.msra.mxu0 0
    %541 = vmatprep.subr.bf16.mxu0 0
    %542 = vmatpush1.bf16.msra.mxu0 0
    %543 = vmatprep.subr.bf16.mxu0 0
    %544 = vmatpush1.bf16.msra.mxu0 0
    %545 = vmatprep.mubr.bf16.mxu0 0
    %546 = vmatmul.mubr.bf16.gmra.mrb[0].mxu0 %v156
    %v547 = vpop.f32.mrb[0].mxu0
    %v548 = vadd.f32 %v495, %v547
    %v549 = vpop.f32.mrb[0].mxu0
    %v550 = vadd.f32 %v497, %v549
    %v551 = vpop.f32.mrb[0].mxu0
    %v552 = vadd.f32 %v499, %v551
    %v553 = vpop.f32.mrb[0].mxu0
    %v554 = vadd.f32 %v501, %v553
    %555 = vmatprep.mubr.bf16.mxu0 0
    %556 = vmatmul.mubr.bf16.gmra.mrb[0].mxu0 %v159
    %v557 = vpop.f32.mrb[0].mxu0
    %v558 = vadd.f32 %v505, %v557
    %v559 = vpop.f32.mrb[0].mxu0
    %v560 = vadd.f32 %v507, %v559
    %v561 = vpop.f32.mrb[0].mxu0
    %v562 = vadd.f32 %v509, %v561
    %v563 = vpop.f32.mrb[0].mxu0
    %v564 = vadd.f32 %v511, %v563
    %565 = vdwg.mxu0
    %v566 = vld [vmem:[%s1] sm:$0xff]
    %v567 = vld [vmem:[%s1 + $0x8] sm:$0xff]
    %v568 = vld [vmem:[%s1 + $0x10] sm:$0xff]
    %v569 = vld [vmem:[%s1 + $0x18] sm:$0xff]
    %v570 = vpack.c.bf16 %v568, %v566
    %v571 = vpack.c.bf16 %v569, %v567
    %v572 = vld [vmem:[#allocation7] sm:$0xff]
    %v573 = vld [vmem:[#allocation7 + $0x8] sm:$0xff]
    %v574 = vld [vmem:[#allocation7 + $0x10] sm:$0xff]
    %v575 = vld [vmem:[#allocation7 + $0x18] sm:$0xff]
    %v576 = vld [vmem:[#allocation7 + $0x20] sm:$0xff]
    %v577 = vld [vmem:[#allocation7 + $0x28] sm:$0xff]
    %v578 = vld [vmem:[#allocation7 + $0x30] sm:$0xff]
    %v579 = vld [vmem:[#allocation7 + $0x38] sm:$0xff]
    %v580 = vld [vmem:[#allocation7 + $0x40] sm:$0xff]
    %v581 = vld [vmem:[#allocation7 + $0x48] sm:$0xff]
    %v582 = vld [vmem:[#allocation7 + $0x50] sm:$0xff]
    %v583 = vld [vmem:[#allocation7 + $0x58] sm:$0xff]
    %v584 = vld [vmem:[#allocation7 + $0x60] sm:$0xff]
    %v585 = vld [vmem:[#allocation7 + $0x68] sm:$0xff]
    %v586 = vld [vmem:[#allocation7 + $0x70] sm:$0xff]
    %v587 = vld [vmem:[#allocation7 + $0x78] sm:$0xff]
    %v588 = vld [vmem:[#allocation7 + $0x80] sm:$0xff]
    %v589 = vld [vmem:[#allocation7 + $0x88] sm:$0xff]
    %v590 = vld [vmem:[#allocation7 + $0x90] sm:$0xff]
    %v591 = vld [vmem:[#allocation7 + $0x98] sm:$0xff]
    %v592 = vld [vmem:[#allocation7 + $0xa0] sm:$0xff]
    %v593 = vld [vmem:[#allocation7 + $0xa8] sm:$0xff]
    %v594 = vld [vmem:[#allocation7 + $0xb0] sm:$0xff]
    %v595 = vld [vmem:[#allocation7 + $0xb8] sm:$0xff]
    %v596 = vld [vmem:[#allocation7 + $0xc0] sm:$0xff]
    %v597 = vld [vmem:[#allocation7 + $0xc8] sm:$0xff]
    %v598 = vld [vmem:[#allocation7 + $0xd0] sm:$0xff]
    %v599 = vld [vmem:[#allocation7 + $0xd8] sm:$0xff]
    %v600 = vld [vmem:[#allocation7 + $0xe0] sm:$0xff]
    %v601 = vld [vmem:[#allocation7 + $0xe8] sm:$0xff]
    %v602 = vld [vmem:[#allocation7 + $0xf0] sm:$0xff]
    %v603 = vld [vmem:[#allocation7 + $0xf8] sm:$0xff]
    %v604 = vld [vmem:[%s5] sm:$0x3]
    %v606 = vlaneseq
    %v607 = vshrl.u32 %v606, 7
    %v608 = vsub.s32 0, %v607
    %v609 = vrot.slane %v604, %v608
    %v610 = vlaneseq
    %v611 = vshrl.u32 %v610, 7
    %v612 = vsub.s32 1, %v611
    %v613 = vrot.slane %v604, %v612
    %v648 = vunpack.c.l.b16 %v572
    %v649 = vunpack.c.h.b16 %v572
    %v650 = vunpack.c.l.b16 %v573
    %v651 = vunpack.c.h.b16 %v573
    %v652 = vunpack.c.l.b16 %v574
    %v653 = vunpack.c.h.b16 %v574
    %v654 = vunpack.c.l.b16 %v575
    %v655 = vunpack.c.h.b16 %v575
    %v656 = vunpack.c.l.b16 %v576
    %v657 = vunpack.c.h.b16 %v576
    %v658 = vunpack.c.l.b16 %v577
    %v659 = vunpack.c.h.b16 %v577
    %v660 = vunpack.c.l.b16 %v578
    %v661 = vunpack.c.h.b16 %v578
    %v662 = vunpack.c.l.b16 %v579
    %v663 = vunpack.c.h.b16 %v579
    %v664 = vunpack.c.l.b16 %v580
    %v665 = vunpack.c.h.b16 %v580
    %v666 = vunpack.c.l.b16 %v581
    %v667 = vunpack.c.h.b16 %v581
    %v668 = vunpack.c.l.b16 %v582
    %v669 = vunpack.c.h.b16 %v582
    %v670 = vunpack.c.l.b16 %v583
    %v671 = vunpack.c.h.b16 %v583
    %v672 = vunpack.c.l.b16 %v584
    %v673 = vunpack.c.h.b16 %v584
    %v674 = vunpack.c.l.b16 %v585
    %v675 = vunpack.c.h.b16 %v585
    %v676 = vunpack.c.l.b16 %v586
    %v677 = vunpack.c.h.b16 %v586
    %v678 = vunpack.c.l.b16 %v587
    %v679 = vunpack.c.h.b16 %v587
    %v680 = vunpack.c.l.b16 %v588
    %v681 = vunpack.c.h.b16 %v588
    %v682 = vunpack.c.l.b16 %v589
    %v683 = vunpack.c.h.b16 %v589
    %v684 = vunpack.c.l.b16 %v590
    %v685 = vunpack.c.h.b16 %v590
    %v686 = vunpack.c.l.b16 %v591
    %v687 = vunpack.c.h.b16 %v591
    %v688 = vunpack.c.l.b16 %v592
    %v689 = vunpack.c.h.b16 %v592
    %v690 = vunpack.c.l.b16 %v593
    %v691 = vunpack.c.h.b16 %v593
    %v692 = vunpack.c.l.b16 %v594
    %v693 = vunpack.c.h.b16 %v594
    %v694 = vunpack.c.l.b16 %v595
    %v695 = vunpack.c.h.b16 %v595
    %v696 = vunpack.c.l.b16 %v596
    %v697 = vunpack.c.h.b16 %v596
    %v698 = vunpack.c.l.b16 %v597
    %v699 = vunpack.c.h.b16 %v597
    %v700 = vunpack.c.l.b16 %v598
    %v701 = vunpack.c.h.b16 %v598
    %v702 = vunpack.c.l.b16 %v599
    %v703 = vunpack.c.h.b16 %v599
    %v704 = vunpack.c.l.b16 %v600
    %v705 = vunpack.c.h.b16 %v600
    %v706 = vunpack.c.l.b16 %v601
    %v707 = vunpack.c.h.b16 %v601
    %v708 = vunpack.c.l.b16 %v602
    %v709 = vunpack.c.h.b16 %v602
    %v710 = vunpack.c.l.b16 %v603
    %v711 = vunpack.c.h.b16 %v603
    %v712 = vpack.c.b16 %v650, %v648
    %v713 = vpack.c.b16 %v651, %v649
    %v714 = vpack.c.b16 %v654, %v652
    %v715 = vpack.c.b16 %v655, %v653
    %v716 = vpack.c.b16 %v658, %v656
    %v717 = vpack.c.b16 %v659, %v657
    %v718 = vpack.c.b16 %v662, %v660
    %v719 = vpack.c.b16 %v663, %v661
    %v720 = vpack.c.b16 %v666, %v664
    %v721 = vpack.c.b16 %v667, %v665
    %v722 = vpack.c.b16 %v670, %v668
    %v723 = vpack.c.b16 %v671, %v669
    %v724 = vpack.c.b16 %v674, %v672
    %v725 = vpack.c.b16 %v675, %v673
    %v726 = vpack.c.b16 %v678, %v676
    %v727 = vpack.c.b16 %v679, %v677
    %v728 = vpack.c.b16 %v682, %v680
    %v729 = vpack.c.b16 %v683, %v681
    %v730 = vpack.c.b16 %v686, %v684
    %v731 = vpack.c.b16 %v687, %v685
    %v732 = vpack.c.b16 %v690, %v688
    %v733 = vpack.c.b16 %v691, %v689
    %v734 = vpack.c.b16 %v694, %v692
    %v735 = vpack.c.b16 %v695, %v693
    %v736 = vpack.c.b16 %v698, %v696
    %v737 = vpack.c.b16 %v699, %v697
    %v738 = vpack.c.b16 %v702, %v700
    %v739 = vpack.c.b16 %v703, %v701
    %v740 = vpack.c.b16 %v706, %v704
    %v741 = vpack.c.b16 %v707, %v705
    %v742 = vpack.c.b16 %v710, %v708
    %v743 = vpack.c.b16 %v711, %v709
    %776 = vmatprep.subr.bf16.mxu0 %v713
    %777 = vmatpush1.bf16.msra.mxu0 %v712
    %778 = vmatprep.subr.bf16.mxu0 %v715
    %779 = vmatpush1.bf16.msra.mxu0 %v714
    %780 = vmatprep.subr.bf16.mxu0 %v717
    %781 = vmatpush1.bf16.msra.mxu0 %v716
    %782 = vmatprep.subr.bf16.mxu0 %v719
    %783 = vmatpush1.bf16.msra.mxu0 %v718
    %784 = vmatprep.subr.bf16.mxu0 %v721
    %785 = vmatpush1.bf16.msra.mxu0 %v720
    %786 = vmatprep.subr.bf16.mxu0 %v723
    %787 = vmatpush1.bf16.msra.mxu0 %v722
    %788 = vmatprep.subr.bf16.mxu0 %v725
    %789 = vmatpush1.bf16.msra.mxu0 %v724
    %790 = vmatprep.subr.bf16.mxu0 %v727
    %791 = vmatpush1.bf16.msra.mxu0 %v726
    %792 = vmatprep.subr.bf16.mxu0 %v729
    %793 = vmatpush1.bf16.msra.mxu0 %v728
    %794 = vmatprep.subr.bf16.mxu0 %v731
    %795 = vmatpush1.bf16.msra.mxu0 %v730
    %796 = vmatprep.subr.bf16.mxu0 %v733
    %797 = vmatpush1.bf16.msra.mxu0 %v732
    %798 = vmatprep.subr.bf16.mxu0 %v735
    %799 = vmatpush1.bf16.msra.mxu0 %v734
    %800 = vmatprep.subr.bf16.mxu0 %v737
    %801 = vmatpush1.bf16.msra.mxu0 %v736
    %802 = vmatprep.subr.bf16.mxu0 %v739
    %803 = vmatpush1.bf16.msra.mxu0 %v738
    %804 = vmatprep.subr.bf16.mxu0 %v741
    %805 = vmatpush1.bf16.msra.mxu0 %v740
    %806 = vmatprep.subr.bf16.mxu0 %v743
    %807 = vmatpush1.bf16.msra.mxu0 %v742
    %808 = vmatprep.mubr.bf16.mxu0 %v571
    %809 = vmatmul.mubr.bf16.gmra.mrb[0].mxu0 %v570
    %v810 = vpop.f32.mrb[0].mxu0
    %v811 = vadd.f32 %v609, %v810
    %v812 = vpop.f32.mrb[0].mxu0
    %v813 = vadd.f32 %v613, %v812
    %v814 = vpop.f32.mrb[0].mxu0
    %v815 = vadd.f32 %v609, %v814
    %v816 = vpop.f32.mrb[0].mxu0
    %v817 = vadd.f32 %v613, %v816
    %818 = vdwg.mxu0
    %v819 = vpack.c.bf16 %v552, %v548
    %v820 = vpack.c.bf16 %v554, %v550
    %v821 = vpack.c.bf16 %v562, %v558
    %v822 = vpack.c.bf16 %v564, %v560
    %v823 = vpack.c.bf16 %v815, %v811
    %v824 = vpack.c.bf16 %v817, %v813
    %825 = vmatprep.subr.bf16.mxu0 %v820
    %826 = vmatpush1.bf16.xpose.msra.mxu0 %v819
    %827 = vmatprep.subr.bf16.mxu0 %v822
    %828 = vmatpush1.bf16.xpose.msra.mxu0 %v821
    %829 = vmatprep.subr.bf16.mxu0 0
    %830 = vmatpush1.bf16.xpose.msra.mxu0 0
    %831 = vmatprep.subr.bf16.mxu0 0
    %832 = vmatpush1.bf16.xpose.msra.mxu0 0
    %833 = vmatprep.subr.bf16.mxu0 0
    %834 = vmatpush1.bf16.xpose.msra.mxu0 0
    %835 = vmatprep.subr.bf16.mxu0 0
    %836 = vmatpush1.bf16.xpose.msra.mxu0 0
    %837 = vmatprep.subr.bf16.mxu0 0
    %838 = vmatpush1.bf16.xpose.msra.mxu0 0
    %839 = vmatprep.subr.bf16.mxu0 0
    %840 = vmatpush1.bf16.xpose.msra.mxu0 0
    %841 = vmatprep.subr.bf16.mxu0 0
    %842 = vmatpush1.bf16.xpose.msra.mxu0 0
    %843 = vmatprep.subr.bf16.mxu0 0
    %844 = vmatpush1.bf16.xpose.msra.mxu0 0
    %845 = vmatprep.subr.bf16.mxu0 0
    %846 = vmatpush1.bf16.xpose.msra.mxu0 0
    %847 = vmatprep.subr.bf16.mxu0 0
    %848 = vmatpush1.bf16.xpose.msra.mxu0 0
    %849 = vmatprep.subr.bf16.mxu0 0
    %850 = vmatpush1.bf16.xpose.msra.mxu0 0
    %851 = vmatprep.subr.bf16.mxu0 0
    %852 = vmatpush1.bf16.xpose.msra.mxu0 0
    %853 = vmatprep.subr.bf16.mxu0 0
    %854 = vmatpush1.bf16.xpose.msra.mxu0 0
    %855 = vmatprep.subr.bf16.mxu0 0
    %856 = vmatpush1.bf16.xpose.msra.mxu0 0
    %857 = vmatprep.mubr.bf16.mxu0 %v824
    %858 = vmatmul.mubr.bf16.gmra.mrb[0].mxu0 %v823
    %v859 = vpop.f32.mrb[0].mxu0
    %v860 = vadd.f32 0.0, %v859
    %v861 = vpop.f32.mrb[0].mxu0
    %v862 = vpop.f32.mrb[0].mxu0
    %v863 = vadd.f32 0.0, %v862
    %v864 = vpop.f32.mrb[0].mxu0
    %865 = vdwg.mxu0
    %v866 = vmul.f32 %v811, %v811
    %v867 = vmul.f32 %v813, %v813
    %v868 = vmul.f32 %v815, %v815
    %v869 = vmul.f32 %v817, %v817
    %v870 = vadd.f32 %v866, %v867
    %871 = vadd.xlane.f32.xlu0 %v870
    %v872 = vpop.xlane.xlu0 %871
    %v873 = vadd.f32 %v868, %v869
    %874 = vadd.xlane.f32.xlu0 %v873
    %v875 = vpop.xlane.xlu0 %874
    %v876 = vmul.f32 %v548, %v548
    %v877 = vmul.f32 %v550, %v550
    %v878 = vmul.f32 %v552, %v552
    %v879 = vmul.f32 %v554, %v554
    %v880 = vmul.f32 %v558, %v558
    %v881 = vmul.f32 %v560, %v560
    %v882 = vmul.f32 %v562, %v562
    %v883 = vmul.f32 %v564, %v564
    %884 = vmatprep.subr.mxu0 %v877
    %885 = vmatpush1.xpose.msra.mxu0 %v876
    %886 = vmatprep.subr.mxu0 %v879
    %887 = vmatpush1.xpose.msra.mxu0 %v878
    %888 = vmatprep.subr.mxu0 %v881
    %889 = vmatpush1.xpose.msra.mxu0 %v880
    %890 = vmatprep.subr.mxu0 %v883
    %891 = vmatpush1.xpose.msra.mxu0 %v882
    %892 = vmatprep.subr.mxu0 0.0
    %893 = vmatpush1.xpose.msra.mxu0 0.0
    %894 = vmatprep.subr.mxu0 0.0
    %895 = vmatpush1.xpose.msra.mxu0 0.0
    %896 = vmatprep.subr.mxu0 0.0
    %897 = vmatpush1.xpose.msra.mxu0 0.0
    %898 = vmatprep.subr.mxu0 0.0
    %899 = vmatpush1.xpose.msra.mxu0 0.0
    %900 = vmatprep.subr.mxu0 0.0
    %901 = vmatpush1.xpose.msra.mxu0 0.0
    %902 = vmatprep.subr.mxu0 0.0
    %903 = vmatpush1.xpose.msra.mxu0 0.0
    %904 = vmatprep.subr.mxu0 0.0
    %905 = vmatpush1.xpose.msra.mxu0 0.0
    %906 = vmatprep.subr.mxu0 0.0
    %907 = vmatpush1.xpose.msra.mxu0 0.0
    %908 = vmatprep.subr.mxu0 0.0
    %909 = vmatpush1.xpose.msra.mxu0 0.0
    %910 = vmatprep.subr.mxu0 0.0
    %911 = vmatpush1.xpose.msra.mxu0 0.0
    %912 = vmatprep.subr.mxu0 0.0
    %913 = vmatpush1.xpose.msra.mxu0 0.0
    %914 = vmatprep.subr.mxu0 0.0
    %915 = vmatpush1.xpose.msra.mxu0 0.0
    %916 = vmatprep.subr.mxu0 0.0
    %917 = vmatpush1.xpose.msra.mxu0 0.0
    %918 = vmatprep.subr.mxu0 0.0
    %919 = vmatpush1.xpose.msra.mxu0 0.0
    %920 = vmatprep.subr.mxu0 0.0
    %921 = vmatpush1.xpose.msra.mxu0 0.0
    %922 = vmatprep.subr.mxu0 0.0
    %923 = vmatpush1.xpose.msra.mxu0 0.0
    %924 = vmatprep.subr.mxu0 0.0
    %925 = vmatpush1.xpose.msra.mxu0 0.0
    %926 = vmatprep.subr.mxu0 0.0
    %927 = vmatpush1.xpose.msra.mxu0 0.0
    %928 = vmatprep.subr.mxu0 0.0
    %929 = vmatpush1.xpose.msra.mxu0 0.0
    %930 = vmatprep.subr.mxu0 0.0
    %931 = vmatpush1.xpose.msra.mxu0 0.0
    %932 = vmatprep.subr.mxu0 0.0
    %933 = vmatpush1.xpose.msra.mxu0 0.0
    %934 = vmatprep.subr.mxu0 0.0
    %935 = vmatpush1.xpose.msra.mxu0 0.0
    %936 = vmatprep.subr.mxu0 0.0
    %937 = vmatpush1.xpose.msra.mxu0 0.0
    %938 = vmatprep.subr.mxu0 0.0
    %939 = vmatpush1.xpose.msra.mxu0 0.0
    %940 = vmatprep.subr.mxu0 0.0
    %941 = vmatpush1.xpose.msra.mxu0 0.0
    %942 = vmatprep.subr.mxu0 0.0
    %943 = vmatpush1.xpose.msra.mxu0 0.0
    %944 = vmatprep.subr.mxu0 0.0
    %945 = vmatpush1.xpose.msra.mxu0 0.0
    %946 = vmatprep.subr.mxu0 0.0
    %947 = vmatpush1.xpose.msra.mxu0 0.0
    %948 = vmatprep.mubr.f32.mxu0 1.0
    %949 = vmatmul.mubr.f32.gmra.mrb[0].mxu0 1.0
    %v950 = vpop.f32.mrb[0].mxu0
    %v951 = vadd.f32 0.0, %v950
    %v952 = vpop.f32.mrb[0].mxu0
    %953 = vdwg.mxu0
    %v954 = vmul.f32 %v860, 2.0
    %v955 = vmul.f32 %v863, 2.0
    %v956 = vlaneseq
    %v957 = vshrl.u32 %v956, 7
    %v958 = vsub.s32 0, %v957
    %v959 = vrot.slane %v951, %v958
    %v960 = vadd.f32 %v872, %v959
    %v961 = vadd.f32 %v875, %v959
    %v962 = vrcp.pop %v960
    %v963 = vrcp.pop %v961
    %v964 = vmul.f32 %v954, %v962
    %v965 = vmul.f32 %v955, %v963
    %v966 = vpack.c.bf16 %v965, %v964
    %vm967 = vcmask 261120
    %v969 = vsel %vm967, %v966, 0
    %971 = vmatprep.subr.bf16.mxu0 %v820
    %972 = vmatpush1.bf16.msra.mxu0 %v819
    %973 = vmatprep.subr.bf16.mxu0 %v822
    %974 = vmatpush1.bf16.msra.mxu0 %v821
    %975 = vmatprep.subr.bf16.mxu0 0
    %976 = vmatpush1.bf16.msra.mxu0 0
    %977 = vmatprep.subr.bf16.mxu0 0
    %978 = vmatpush1.bf16.msra.mxu0 0
    %979 = vmatprep.subr.bf16.mxu0 0
    %980 = vmatpush1.bf16.msra.mxu0 0
    %981 = vmatprep.subr.bf16.mxu0 0
    %982 = vmatpush1.bf16.msra.mxu0 0
    %983 = vmatprep.subr.bf16.mxu0 0
    %984 = vmatpush1.bf16.msra.mxu0 0
    %985 = vmatprep.subr.bf16.mxu0 0
    %986 = vmatpush1.bf16.msra.mxu0 0
    %987 = vmatprep.subr.bf16.mxu0 0
    %988 = vmatpush1.bf16.msra.mxu0 0
    %989 = vmatprep.subr.bf16.mxu0 0
    %990 = vmatpush1.bf16.msra.mxu0 0
    %991 = vmatprep.subr.bf16.mxu0 0
    %992 = vmatpush1.bf16.msra.mxu0 0
    %993 = vmatprep.subr.bf16.mxu0 0
    %994 = vmatpush1.bf16.msra.mxu0 0
    %995 = vmatprep.subr.bf16.mxu0 0
    %996 = vmatpush1.bf16.msra.mxu0 0
    %997 = vmatprep.subr.bf16.mxu0 0
    %998 = vmatpush1.bf16.msra.mxu0 0
    %999 = vmatprep.subr.bf16.mxu0 0
    %1000 = vmatpush1.bf16.msra.mxu0 0
    %1001 = vmatprep.subr.bf16.mxu0 0
    %1002 = vmatpush1.bf16.msra.mxu0 0
    %1003 = vmatprep.mubr.bf16.mxu0 0
    %1004 = vmatmul.mubr.bf16.gmra.mrb[0].mxu0 %v969
    %v1005 = vpop.f32.mrb[0].mxu0
    %v1006 = vadd.f32 0.0, %v1005
    %v1007 = vpop.f32.mrb[0].mxu0
    %v1008 = vadd.f32 0.0, %v1007
    %v1009 = vpop.f32.mrb[0].mxu0
    %v1010 = vadd.f32 0.0, %v1009
    %v1011 = vpop.f32.mrb[0].mxu0
    %v1012 = vadd.f32 0.0, %v1011
    %1013 = vdwg.mxu0
    %v1014 = vpack.c.bf16 %v1010, %v1006
    %v1015 = vpack.c.bf16 %v1012, %v1008
    %v1016 = vld [vmem:[#allocation8] sm:$0xff]
    %v1017 = vld [vmem:[#allocation8 + $0x8] sm:$0xff]
    %v1018 = vld [vmem:[#allocation8 + $0x10] sm:$0xff]
    %v1019 = vld [vmem:[#allocation8 + $0x18] sm:$0xff]
    %v1020 = vld [vmem:[#allocation8 + $0x20] sm:$0xff]
    %v1021 = vld [vmem:[#allocation8 + $0x28] sm:$0xff]
    %v1022 = vld [vmem:[#allocation8 + $0x30] sm:$0xff]
    %v1023 = vld [vmem:[#allocation8 + $0x38] sm:$0xff]
    %v1024 = vld [vmem:[#allocation8 + $0x40] sm:$0xff]
    %v1025 = vld [vmem:[#allocation8 + $0x48] sm:$0xff]
    %v1026 = vld [vmem:[#allocation8 + $0x50] sm:$0xff]
    %v1027 = vld [vmem:[#allocation8 + $0x58] sm:$0xff]
    %v1028 = vld [vmem:[#allocation8 + $0x60] sm:$0xff]
    %v1029 = vld [vmem:[#allocation8 + $0x68] sm:$0xff]
    %v1030 = vld [vmem:[#allocation8 + $0x70] sm:$0xff]
    %v1031 = vld [vmem:[#allocation8 + $0x78] sm:$0xff]
    %v1032 = vld [vmem:[#allocation8 + $0x80] sm:$0xff]
    %v1033 = vld [vmem:[#allocation8 + $0x88] sm:$0xff]
    %v1034 = vld [vmem:[#allocation8 + $0x90] sm:$0xff]
    %v1035 = vld [vmem:[#allocation8 + $0x98] sm:$0xff]
    %v1036 = vld [vmem:[#allocation8 + $0xa0] sm:$0xff]
    %v1037 = vld [vmem:[#allocation8 + $0xa8] sm:$0xff]
    %v1038 = vld [vmem:[#allocation8 + $0xb0] sm:$0xff]
    %v1039 = vld [vmem:[#allocation8 + $0xb8] sm:$0xff]
    %v1040 = vld [vmem:[#allocation8 + $0xc0] sm:$0xff]
    %v1041 = vld [vmem:[#allocation8 + $0xc8] sm:$0xff]
    %v1042 = vld [vmem:[#allocation8 + $0xd0] sm:$0xff]
    %v1043 = vld [vmem:[#allocation8 + $0xd8] sm:$0xff]
    %v1044 = vld [vmem:[#allocation8 + $0xe0] sm:$0xff]
    %v1045 = vld [vmem:[#allocation8 + $0xe8] sm:$0xff]
    %v1046 = vld [vmem:[#allocation8 + $0xf0] sm:$0xff]
    %v1047 = vld [vmem:[#allocation8 + $0xf8] sm:$0xff]
    %v1048 = vld [vmem:[#allocation10] sm:$0x3]
    %v1050 = vlaneseq
    %v1051 = vshrl.u32 %v1050, 7
    %v1052 = vsub.s32 0, %v1051
    %v1053 = vrot.slane %v1048, %v1052
    %v1054 = vlaneseq
    %v1055 = vshrl.u32 %v1054, 7
    %v1056 = vsub.s32 1, %v1055
    %v1057 = vrot.slane %v1048, %v1056
    %v1092 = vunpack.c.l.b16 %v1016
    %v1093 = vunpack.c.h.b16 %v1016
    %v1094 = vunpack.c.l.b16 %v1017
    %v1095 = vunpack.c.h.b16 %v1017
    %v1096 = vunpack.c.l.b16 %v1018
    %v1097 = vunpack.c.h.b16 %v1018
    %v1098 = vunpack.c.l.b16 %v1019
    %v1099 = vunpack.c.h.b16 %v1019
    %v1100 = vunpack.c.l.b16 %v1020
    %v1101 = vunpack.c.h.b16 %v1020
    %v1102 = vunpack.c.l.b16 %v1021
    %v1103 = vunpack.c.h.b16 %v1021
    %v1104 = vunpack.c.l.b16 %v1022
    %v1105 = vunpack.c.h.b16 %v1022
    %v1106 = vunpack.c.l.b16 %v1023
    %v1107 = vunpack.c.h.b16 %v1023
    %v1108 = vunpack.c.l.b16 %v1024
    %v1109 = vunpack.c.h.b16 %v1024
    %v1110 = vunpack.c.l.b16 %v1025
    %v1111 = vunpack.c.h.b16 %v1025
    %v1112 = vunpack.c.l.b16 %v1026
    %v1113 = vunpack.c.h.b16 %v1026
    %v1114 = vunpack.c.l.b16 %v1027
    %v1115 = vunpack.c.h.b16 %v1027
    %v1116 = vunpack.c.l.b16 %v1028
    %v1117 = vunpack.c.h.b16 %v1028
    %v1118 = vunpack.c.l.b16 %v1029
    %v1119 = vunpack.c.h.b16 %v1029
    %v1120 = vunpack.c.l.b16 %v1030
    %v1121 = vunpack.c.h.b16 %v1030
    %v1122 = vunpack.c.l.b16 %v1031
    %v1123 = vunpack.c.h.b16 %v1031
    %v1124 = vunpack.c.l.b16 %v1032
    %v1125 = vunpack.c.h.b16 %v1032
    %v1126 = vunpack.c.l.b16 %v1033
    %v1127 = vunpack.c.h.b16 %v1033
    %v1128 = vunpack.c.l.b16 %v1034
    %v1129 = vunpack.c.h.b16 %v1034
    %v1130 = vunpack.c.l.b16 %v1035
    %v1131 = vunpack.c.h.b16 %v1035
    %v1132 = vunpack.c.l.b16 %v1036
    %v1133 = vunpack.c.h.b16 %v1036
    %v1134 = vunpack.c.l.b16 %v1037
    %v1135 = vunpack.c.h.b16 %v1037
    %v1136 = vunpack.c.l.b16 %v1038
    %v1137 = vunpack.c.h.b16 %v1038
    %v1138 = vunpack.c.l.b16 %v1039
    %v1139 = vunpack.c.h.b16 %v1039
    %v1140 = vunpack.c.l.b16 %v1040
    %v1141 = vunpack.c.h.b16 %v1040
    %v1142 = vunpack.c.l.b16 %v1041
    %v1143 = vunpack.c.h.b16 %v1041
    %v1144 = vunpack.c.l.b16 %v1042
    %v1145 = vunpack.c.h.b16 %v1042
    %v1146 = vunpack.c.l.b16 %v1043
    %v1147 = vunpack.c.h.b16 %v1043
    %v1148 = vunpack.c.l.b16 %v1044
    %v1149 = vunpack.c.h.b16 %v1044
    %v1150 = vunpack.c.l.b16 %v1045
    %v1151 = vunpack.c.h.b16 %v1045
    %v1152 = vunpack.c.l.b16 %v1046
    %v1153 = vunpack.c.h.b16 %v1046
    %v1154 = vunpack.c.l.b16 %v1047
    %v1155 = vunpack.c.h.b16 %v1047
    %v1156 = vpack.c.b16 %v1094, %v1092
    %v1157 = vpack.c.b16 %v1095, %v1093
    %v1158 = vpack.c.b16 %v1098, %v1096
    %v1159 = vpack.c.b16 %v1099, %v1097
    %v1160 = vpack.c.b16 %v1102, %v1100
    %v1161 = vpack.c.b16 %v1103, %v1101
    %v1162 = vpack.c.b16 %v1106, %v1104
    %v1163 = vpack.c.b16 %v1107, %v1105
    %v1164 = vpack.c.b16 %v1110, %v1108
    %v1165 = vpack.c.b16 %v1111, %v1109
    %v1166 = vpack.c.b16 %v1114, %v1112
    %v1167 = vpack.c.b16 %v1115, %v1113
    %v1168 = vpack.c.b16 %v1118, %v1116
    %v1169 = vpack.c.b16 %v1119, %v1117
    %v1170 = vpack.c.b16 %v1122, %v1120
    %v1171 = vpack.c.b16 %v1123, %v1121
    %v1172 = vpack.c.b16 %v1126, %v1124
    %v1173 = vpack.c.b16 %v1127, %v1125
    %v1174 = vpack.c.b16 %v1130, %v1128
    %v1175 = vpack.c.b16 %v1131, %v1129
    %v1176 = vpack.c.b16 %v1134, %v1132
    %v1177 = vpack.c.b16 %v1135, %v1133
    %v1178 = vpack.c.b16 %v1138, %v1136
    %v1179 = vpack.c.b16 %v1139, %v1137
    %v1180 = vpack.c.b16 %v1142, %v1140
    %v1181 = vpack.c.b16 %v1143, %v1141
    %v1182 = vpack.c.b16 %v1146, %v1144
    %v1183 = vpack.c.b16 %v1147, %v1145
    %v1184 = vpack.c.b16 %v1150, %v1148
    %v1185 = vpack.c.b16 %v1151, %v1149
    %v1186 = vpack.c.b16 %v1154, %v1152
    %v1187 = vpack.c.b16 %v1155, %v1153
    %1220 = vmatprep.subr.bf16.mxu0 %v1157
    %1221 = vmatpush1.bf16.msra.mxu0 %v1156
    %1222 = vmatprep.subr.bf16.mxu0 %v1159
    %1223 = vmatpush1.bf16.msra.mxu0 %v1158
    %1224 = vmatprep.subr.bf16.mxu0 %v1161
    %1225 = vmatpush1.bf16.msra.mxu0 %v1160
    %1226 = vmatprep.subr.bf16.mxu0 %v1163
    %1227 = vmatpush1.bf16.msra.mxu0 %v1162
    %1228 = vmatprep.subr.bf16.mxu0 %v1165
    %1229 = vmatpush1.bf16.msra.mxu0 %v1164
    %1230 = vmatprep.subr.bf16.mxu0 %v1167
    %1231 = vmatpush1.bf16.msra.mxu0 %v1166
    %1232 = vmatprep.subr.bf16.mxu0 %v1169
    %1233 = vmatpush1.bf16.msra.mxu0 %v1168
    %1234 = vmatprep.subr.bf16.mxu0 %v1171
    %1235 = vmatpush1.bf16.msra.mxu0 %v1170
    %1236 = vmatprep.subr.bf16.mxu0 %v1173
    %1237 = vmatpush1.bf16.msra.mxu0 %v1172
    %1238 = vmatprep.subr.bf16.mxu0 %v1175
    %1239 = vmatpush1.bf16.msra.mxu0 %v1174
    %1240 = vmatprep.subr.bf16.mxu0 %v1177
    %1241 = vmatpush1.bf16.msra.mxu0 %v1176
    %1242 = vmatprep.subr.bf16.mxu0 %v1179
    %1243 = vmatpush1.bf16.msra.mxu0 %v1178
    %1244 = vmatprep.subr.bf16.mxu0 %v1181
    %1245 = vmatpush1.bf16.msra.mxu0 %v1180
    %1246 = vmatprep.subr.bf16.mxu0 %v1183
    %1247 = vmatpush1.bf16.msra.mxu0 %v1182
    %1248 = vmatprep.subr.bf16.mxu0 %v1185
    %1249 = vmatpush1.bf16.msra.mxu0 %v1184
    %1250 = vmatprep.subr.bf16.mxu0 %v1187
    %1251 = vmatpush1.bf16.msra.mxu0 %v1186
    %1252 = vmatprep.mubr.bf16.mxu0 %v1015
    %1253 = vmatmul.mubr.bf16.gmra.mrb[0].mxu0 %v1014
    %v1254 = vpop.f32.mrb[0].mxu0
    %v1255 = vadd.f32 %v1053, %v1254
    %v1256 = vpop.f32.mrb[0].mxu0
    %v1257 = vadd.f32 %v1057, %v1256
    %v1258 = vpop.f32.mrb[0].mxu0
    %v1259 = vadd.f32 %v1053, %v1258
    %v1260 = vpop.f32.mrb[0].mxu0
    %v1261 = vadd.f32 %v1057, %v1260
    %1262 = vdwg.mxu0
    %v1263 = vmax.f32 %v1255, 0.0
    %v1264 = vmax.f32 %v1257, 0.0
    %v1265 = vmax.f32 %v1259, 0.0
    %v1266 = vmax.f32 %v1261, 0.0
    %v1267 = vadd.f32 %v566, %v1263
    %v1268 = vadd.f32 %v567, %v1264
    %v1269 = vadd.f32 %v568, %v1265
    %v1270 = vadd.f32 %v569, %v1266
    %v1271 = vadd.f32 %v1267, %v1268
    %1272 = vadd.xlane.f32.xlu0 %v1271
    %v1273 = vpop.xlane.xlu0 %1272
    %v1274 = vadd.f32 %v1269, %v1270
    %1275 = vadd.xlane.f32.xlu0 %v1274
    %v1276 = vpop.xlane.xlu0 %1275
    %v1277 = vmul.f32 %v1273, 0.00390625
    %v1278 = vmul.f32 %v1276, 0.00390625
    %v1279 = vmul.f32 %v1267, %v1267
    %v1280 = vmul.f32 %v1268, %v1268
    %v1281 = vmul.f32 %v1269, %v1269
    %v1282 = vmul.f32 %v1270, %v1270
    %v1283 = vadd.f32 %v1279, %v1280
    %1284 = vadd.xlane.f32.xlu0 %v1283
    %v1285 = vpop.xlane.xlu0 %1284
    %v1286 = vadd.f32 %v1281, %v1282
    %1287 = vadd.xlane.f32.xlu0 %v1286
    %v1288 = vpop.xlane.xlu0 %1287
    %v1289 = vmul.f32 %v1285, 0.00390625
    %v1290 = vmul.f32 %v1288, 0.00390625
    %v1291 = vsub.f32 %v1267, %v1277
    %v1292 = vsub.f32 %v1268, %v1277
    %v1293 = vsub.f32 %v1269, %v1278
    %v1294 = vsub.f32 %v1270, %v1278
    %v1295 = vmul.f32 %v1277, %v1277
    %v1296 = vmul.f32 %v1278, %v1278
    %v1297 = vsub.f32 %v1289, %v1295
    %v1298 = vsub.f32 %v1290, %v1296
    %v1299 = vadd.f32 %v1297, 1e-05
    %v1300 = vadd.f32 %v1298, 1e-05
    %v1301 = vrsqrt.pop %v1299
    %v1302 = vrsqrt.pop %v1300
    %v1303 = vmul.f32 %v1291, %v1301
    %v1304 = vmul.f32 %v1292, %v1301
    %v1305 = vmul.f32 %v1293, %v1302
    %v1306 = vmul.f32 %v1294, %v1302
    %v1307 = vld [vmem:[%s12] sm:$0x3]
    %v1309 = vlaneseq
    %v1310 = vshrl.u32 %v1309, 7
    %v1311 = vsub.s32 0, %v1310
    %v1312 = vrot.slane %v1307, %v1311
    %v1313 = vlaneseq
    %v1314 = vshrl.u32 %v1313, 7
    %v1315 = vsub.s32 1, %v1314
    %v1316 = vrot.slane %v1307, %v1315
    %v1319 = vmul.f32 %v1303, %v1312
    %v1320 = vmul.f32 %v1304, %v1316
    %v1321 = vmul.f32 %v1305, %v1312
    %v1322 = vmul.f32 %v1306, %v1316
    %v1323 = vld [vmem:[%s13] sm:$0x3]
    %v1325 = vlaneseq
    %v1326 = vshrl.u32 %v1325, 7
    %v1327 = vsub.s32 0, %v1326
    %v1328 = vrot.slane %v1323, %v1327
    %v1329 = vlaneseq
    %v1330 = vshrl.u32 %v1329, 7
    %v1331 = vsub.s32 1, %v1330
    %v1332 = vrot.slane %v1323, %v1331
    %v1335 = vadd.f32 %v1319, %v1328
    %v1336 = vadd.f32 %v1320, %v1332
    %v1337 = vadd.f32 %v1321, %v1328
    %v1338 = vadd.f32 %v1322, %v1332
    %v1339 = vpack.c.bf16 %v1337, %v1335
    %v1340 = vpack.c.bf16 %v1338, %v1336
    %v1341 = vld [vmem:[#allocation11] sm:$0xff]
    %v1342 = vld [vmem:[#allocation11 + $0x8] sm:$0xff]
    %v1343 = vld [vmem:[#allocation11 + $0x10] sm:$0xff]
    %v1344 = vld [vmem:[#allocation11 + $0x18] sm:$0xff]
    %v1345 = vld [vmem:[#allocation11 + $0x20] sm:$0xff]
    %v1346 = vld [vmem:[#allocation11 + $0x28] sm:$0xff]
    %v1347 = vld [vmem:[#allocation11 + $0x30] sm:$0xff]
    %v1348 = vld [vmem:[#allocation11 + $0x38] sm:$0xff]
    %v1349 = vld [vmem:[#allocation11 + $0x40] sm:$0xff]
    %v1350 = vld [vmem:[#allocation11 + $0x48] sm:$0xff]
    %v1351 = vld [vmem:[#allocation11 + $0x50] sm:$0xff]
    %v1352 = vld [vmem:[#allocation11 + $0x58] sm:$0xff]
    %v1353 = vld [vmem:[#allocation11 + $0x60] sm:$0xff]
    %v1354 = vld [vmem:[#allocation11 + $0x68] sm:$0xff]
    %v1355 = vld [vmem:[#allocation11 + $0x70] sm:$0xff]
    %v1356 = vld [vmem:[#allocation11 + $0x78] sm:$0xff]
    %v1357 = vld [vmem:[#allocation11 + $0x80] sm:$0xff]
    %v1358 = vld [vmem:[#allocation11 + $0x88] sm:$0xff]
    %v1359 = vld [vmem:[#allocation11 + $0x90] sm:$0xff]
    %v1360 = vld [vmem:[#allocation11 + $0x98] sm:$0xff]
    %v1361 = vld [vmem:[#allocation11 + $0xa0] sm:$0xff]
    %v1362 = vld [vmem:[#allocation11 + $0xa8] sm:$0xff]
    %v1363 = vld [vmem:[#allocation11 + $0xb0] sm:$0xff]
    %v1364 = vld [vmem:[#allocation11 + $0xb8] sm:$0xff]
    %v1365 = vld [vmem:[#allocation11 + $0xc0] sm:$0xff]
    %v1366 = vld [vmem:[#allocation11 + $0xc8] sm:$0xff]
    %v1367 = vld [vmem:[#allocation11 + $0xd0] sm:$0xff]
    %v1368 = vld [vmem:[#allocation11 + $0xd8] sm:$0xff]
    %v1369 = vld [vmem:[#allocation11 + $0xe0] sm:$0xff]
    %v1370 = vld [vmem:[#allocation11 + $0xe8] sm:$0xff]
    %v1371 = vld [vmem:[#allocation11 + $0xf0] sm:$0xff]
    %v1372 = vld [vmem:[#allocation11 + $0xf8] sm:$0xff]
    %v1373 = vld [vmem:[%s9] sm:$0x3]
    %v1375 = vlaneseq
    %v1376 = vshrl.u32 %v1375, 7
    %v1377 = vsub.s32 0, %v1376
    %v1378 = vrot.slane %v1373, %v1377
    %v1379 = vlaneseq
    %v1380 = vshrl.u32 %v1379, 7
    %v1381 = vsub.s32 1, %v1380
    %v1382 = vrot.slane %v1373, %v1381
    %v1417 = vunpack.c.l.b16 %v1341
    %v1418 = vunpack.c.h.b16 %v1341
    %v1419 = vunpack.c.l.b16 %v1342
    %v1420 = vunpack.c.h.b16 %v1342
    %v1421 = vunpack.c.l.b16 %v1343
    %v1422 = vunpack.c.h.b16 %v1343
    %v1423 = vunpack.c.l.b16 %v1344
    %v1424 = vunpack.c.h.b16 %v1344
    %v1425 = vunpack.c.l.b16 %v1345
    %v1426 = vunpack.c.h.b16 %v1345
    %v1427 = vunpack.c.l.b16 %v1346
    %v1428 = vunpack.c.h.b16 %v1346
    %v1429 = vunpack.c.l.b16 %v1347
    %v1430 = vunpack.c.h.b16 %v1347
    %v1431 = vunpack.c.l.b16 %v1348
    %v1432 = vunpack.c.h.b16 %v1348
    %v1433 = vunpack.c.l.b16 %v1349
    %v1434 = vunpack.c.h.b16 %v1349
    %v1435 = vunpack.c.l.b16 %v1350
    %v1436 = vunpack.c.h.b16 %v1350
    %v1437 = vunpack.c.l.b16 %v1351
    %v1438 = vunpack.c.h.b16 %v1351
    %v1439 = vunpack.c.l.b16 %v1352
    %v1440 = vunpack.c.h.b16 %v1352
    %v1441 = vunpack.c.l.b16 %v1353
    %v1442 = vunpack.c.h.b16 %v1353
    %v1443 = vunpack.c.l.b16 %v1354
    %v1444 = vunpack.c.h.b16 %v1354
    %v1445 = vunpack.c.l.b16 %v1355
    %v1446 = vunpack.c.h.b16 %v1355
    %v1447 = vunpack.c.l.b16 %v1356
    %v1448 = vunpack.c.h.b16 %v1356
    %v1449 = vunpack.c.l.b16 %v1357
    %v1450 = vunpack.c.h.b16 %v1357
    %v1451 = vunpack.c.l.b16 %v1358
    %v1452 = vunpack.c.h.b16 %v1358
    %v1453 = vunpack.c.l.b16 %v1359
    %v1454 = vunpack.c.h.b16 %v1359
    %v1455 = vunpack.c.l.b16 %v1360
    %v1456 = vunpack.c.h.b16 %v1360
    %v1457 = vunpack.c.l.b16 %v1361
    %v1458 = vunpack.c.h.b16 %v1361
    %v1459 = vunpack.c.l.b16 %v1362
    %v1460 = vunpack.c.h.b16 %v1362
    %v1461 = vunpack.c.l.b16 %v1363
    %v1462 = vunpack.c.h.b16 %v1363
    %v1463 = vunpack.c.l.b16 %v1364
    %v1464 = vunpack.c.h.b16 %v1364
    %v1465 = vunpack.c.l.b16 %v1365
    %v1466 = vunpack.c.h.b16 %v1365
    %v1467 = vunpack.c.l.b16 %v1366
    %v1468 = vunpack.c.h.b16 %v1366
    %v1469 = vunpack.c.l.b16 %v1367
    %v1470 = vunpack.c.h.b16 %v1367
    %v1471 = vunpack.c.l.b16 %v1368
    %v1472 = vunpack.c.h.b16 %v1368
    %v1473 = vunpack.c.l.b16 %v1369
    %v1474 = vunpack.c.h.b16 %v1369
    %v1475 = vunpack.c.l.b16 %v1370
    %v1476 = vunpack.c.h.b16 %v1370
    %v1477 = vunpack.c.l.b16 %v1371
    %v1478 = vunpack.c.h.b16 %v1371
    %v1479 = vunpack.c.l.b16 %v1372
    %v1480 = vunpack.c.h.b16 %v1372
    %v1481 = vpack.c.b16 %v1419, %v1417
    %v1482 = vpack.c.b16 %v1420, %v1418
    %v1483 = vpack.c.b16 %v1423, %v1421
    %v1484 = vpack.c.b16 %v1424, %v1422
    %v1485 = vpack.c.b16 %v1427, %v1425
    %v1486 = vpack.c.b16 %v1428, %v1426
    %v1487 = vpack.c.b16 %v1431, %v1429
    %v1488 = vpack.c.b16 %v1432, %v1430
    %v1489 = vpack.c.b16 %v1435, %v1433
    %v1490 = vpack.c.b16 %v1436, %v1434
    %v1491 = vpack.c.b16 %v1439, %v1437
    %v1492 = vpack.c.b16 %v1440, %v1438
    %v1493 = vpack.c.b16 %v1443, %v1441
    %v1494 = vpack.c.b16 %v1444, %v1442
    %v1495 = vpack.c.b16 %v1447, %v1445
    %v1496 = vpack.c.b16 %v1448, %v1446
    %v1497 = vpack.c.b16 %v1451, %v1449
    %v1498 = vpack.c.b16 %v1452, %v1450
    %v1499 = vpack.c.b16 %v1455, %v1453
    %v1500 = vpack.c.b16 %v1456, %v1454
    %v1501 = vpack.c.b16 %v1459, %v1457
    %v1502 = vpack.c.b16 %v1460, %v1458
    %v1503 = vpack.c.b16 %v1463, %v1461
    %v1504 = vpack.c.b16 %v1464, %v1462
    %v1505 = vpack.c.b16 %v1467, %v1465
    %v1506 = vpack.c.b16 %v1468, %v1466
    %v1507 = vpack.c.b16 %v1471, %v1469
    %v1508 = vpack.c.b16 %v1472, %v1470
    %v1509 = vpack.c.b16 %v1475, %v1473
    %v1510 = vpack.c.b16 %v1476, %v1474
    %v1511 = vpack.c.b16 %v1479, %v1477
    %v1512 = vpack.c.b16 %v1480, %v1478
    %1545 = vmatprep.subr.bf16.mxu0 %v1482
    %1546 = vmatpush1.bf16.msra.mxu0 %v1481
    %1547 = vmatprep.subr.bf16.mxu0 %v1484
    %1548 = vmatpush1.bf16.msra.mxu0 %v1483
    %1549 = vmatprep.subr.bf16.mxu0 %v1486
    %1550 = vmatpush1.bf16.msra.mxu0 %v1485
    %1551 = vmatprep.subr.bf16.mxu0 %v1488
    %1552 = vmatpush1.bf16.msra.mxu0 %v1487
    %1553 = vmatprep.subr.bf16.mxu0 %v1490
    %1554 = vmatpush1.bf16.msra.mxu0 %v1489
    %1555 = vmatprep.subr.bf16.mxu0 %v1492
    %1556 = vmatpush1.bf16.msra.mxu0 %v1491
    %1557 = vmatprep.subr.bf16.mxu0 %v1494
    %1558 = vmatpush1.bf16.msra.mxu0 %v1493
    %1559 = vmatprep.subr.bf16.mxu0 %v1496
    %1560 = vmatpush1.bf16.msra.mxu0 %v1495
    %1561 = vmatprep.subr.bf16.mxu0 %v1498
    %1562 = vmatpush1.bf16.msra.mxu0 %v1497
    %1563 = vmatprep.subr.bf16.mxu0 %v1500
    %1564 = vmatpush1.bf16.msra.mxu0 %v1499
    %1565 = vmatprep.subr.bf16.mxu0 %v1502
    %1566 = vmatpush1.bf16.msra.mxu0 %v1501
    %1567 = vmatprep.subr.bf16.mxu0 %v1504
    %1568 = vmatpush1.bf16.msra.mxu0 %v1503
    %1569 = vmatprep.subr.bf16.mxu0 %v1506
    %1570 = vmatpush1.bf16.msra.mxu0 %v1505
    %1571 = vmatprep.subr.bf16.mxu0 %v1508
    %1572 = vmatpush1.bf16.msra.mxu0 %v1507
    %1573 = vmatprep.subr.bf16.mxu0 %v1510
    %1574 = vmatpush1.bf16.msra.mxu0 %v1509
    %1575 = vmatprep.subr.bf16.mxu0 %v1512
    %1576 = vmatpush1.bf16.msra.mxu0 %v1511
    %1577 = vmatprep.mubr.bf16.mxu0 %v1340
    %1578 = vmatmul.mubr.bf16.gmra.mrb[0].mxu0 %v1339
    %v1579 = vpop.f32.mrb[0].mxu0
    %v1580 = vadd.f32 %v1378, %v1579
    %v1581 = vpop.f32.mrb[0].mxu0
    %v1582 = vadd.f32 %v1382, %v1581
    %v1583 = vpop.f32.mrb[0].mxu0
    %v1584 = vadd.f32 %v1378, %v1583
    %v1585 = vpop.f32.mrb[0].mxu0
    %v1586 = vadd.f32 %v1382, %v1585
    %1587 = vdwg.mxu0
    %v1588 = vmax.f32 %v1580, 0.0
    %v1589 = vmax.f32 %v1582, 0.0
    %v1590 = vmax.f32 %v1584, 0.0
    %v1591 = vmax.f32 %v1586, 0.0
    %v1592 = vpack.c.bf16 %v1590, %v1588
    %v1593 = vpack.c.bf16 %v1591, %v1589
    %v1594 = vld [vmem:[#allocation13] sm:$0xff]
    %v1595 = vld [vmem:[#allocation13 + $0x8] sm:$0xff]
    %v1596 = vld [vmem:[#allocation13 + $0x10] sm:$0xff]
    %v1597 = vld [vmem:[#allocation13 + $0x18] sm:$0xff]
    %v1598 = vld [vmem:[#allocation13 + $0x20] sm:$0xff]
    %v1599 = vld [vmem:[#allocation13 + $0x28] sm:$0xff]
    %v1600 = vld [vmem:[#allocation13 + $0x30] sm:$0xff]
    %v1601 = vld [vmem:[#allocation13 + $0x38] sm:$0xff]
    %v1602 = vld [vmem:[#allocation13 + $0x40] sm:$0xff]
    %v1603 = vld [vmem:[#allocation13 + $0x48] sm:$0xff]
    %v1604 = vld [vmem:[#allocation13 + $0x50] sm:$0xff]
    %v1605 = vld [vmem:[#allocation13 + $0x58] sm:$0xff]
    %v1606 = vld [vmem:[#allocation13 + $0x60] sm:$0xff]
    %v1607 = vld [vmem:[#allocation13 + $0x68] sm:$0xff]
    %v1608 = vld [vmem:[#allocation13 + $0x70] sm:$0xff]
    %v1609 = vld [vmem:[#allocation13 + $0x78] sm:$0xff]
    %v1610 = vld [vmem:[#allocation13 + $0x80] sm:$0xff]
    %v1611 = vld [vmem:[#allocation13 + $0x88] sm:$0xff]
    %v1612 = vld [vmem:[#allocation13 + $0x90] sm:$0xff]
    %v1613 = vld [vmem:[#allocation13 + $0x98] sm:$0xff]
    %v1614 = vld [vmem:[#allocation13 + $0xa0] sm:$0xff]
    %v1615 = vld [vmem:[#allocation13 + $0xa8] sm:$0xff]
    %v1616 = vld [vmem:[#allocation13 + $0xb0] sm:$0xff]
    %v1617 = vld [vmem:[#allocation13 + $0xb8] sm:$0xff]
    %v1618 = vld [vmem:[#allocation13 + $0xc0] sm:$0xff]
    %v1619 = vld [vmem:[#allocation13 + $0xc8] sm:$0xff]
    %v1620 = vld [vmem:[#allocation13 + $0xd0] sm:$0xff]
    %v1621 = vld [vmem:[#allocation13 + $0xd8] sm:$0xff]
    %v1622 = vld [vmem:[#allocation13 + $0xe0] sm:$0xff]
    %v1623 = vld [vmem:[#allocation13 + $0xe8] sm:$0xff]
    %v1624 = vld [vmem:[#allocation13 + $0xf0] sm:$0xff]
    %v1625 = vld [vmem:[#allocation13 + $0xf8] sm:$0xff]
    %v1658 = vunpack.c.l.b16 %v1594
    %v1659 = vunpack.c.h.b16 %v1594
    %v1660 = vunpack.c.l.b16 %v1595
    %v1661 = vunpack.c.h.b16 %v1595
    %v1662 = vunpack.c.l.b16 %v1596
    %v1663 = vunpack.c.h.b16 %v1596
    %v1664 = vunpack.c.l.b16 %v1597
    %v1665 = vunpack.c.h.b16 %v1597
    %v1666 = vunpack.c.l.b16 %v1598
    %v1667 = vunpack.c.h.b16 %v1598
    %v1668 = vunpack.c.l.b16 %v1599
    %v1669 = vunpack.c.h.b16 %v1599
    %v1670 = vunpack.c.l.b16 %v1600
    %v1671 = vunpack.c.h.b16 %v1600
    %v1672 = vunpack.c.l.b16 %v1601
    %v1673 = vunpack.c.h.b16 %v1601
    %v1674 = vunpack.c.l.b16 %v1602
    %v1675 = vunpack.c.h.b16 %v1602
    %v1676 = vunpack.c.l.b16 %v1603
    %v1677 = vunpack.c.h.b16 %v1603
    %v1678 = vunpack.c.l.b16 %v1604
    %v1679 = vunpack.c.h.b16 %v1604
    %v1680 = vunpack.c.l.b16 %v1605
    %v1681 = vunpack.c.h.b16 %v1605
    %v1682 = vunpack.c.l.b16 %v1606
    %v1683 = vunpack.c.h.b16 %v1606
    %v1684 = vunpack.c.l.b16 %v1607
    %v1685 = vunpack.c.h.b16 %v1607
    %v1686 = vunpack.c.l.b16 %v1608
    %v1687 = vunpack.c.h.b16 %v1608
    %v1688 = vunpack.c.l.b16 %v1609
    %v1689 = vunpack.c.h.b16 %v1609
    %v1690 = vunpack.c.l.b16 %v1610
    %v1691 = vunpack.c.h.b16 %v1610
    %v1692 = vunpack.c.l.b16 %v1611
    %v1693 = vunpack.c.h.b16 %v1611
    %v1694 = vunpack.c.l.b16 %v1612
    %v1695 = vunpack.c.h.b16 %v1612
    %v1696 = vunpack.c.l.b16 %v1613
    %v1697 = vunpack.c.h.b16 %v1613
    %v1698 = vunpack.c.l.b16 %v1614
    %v1699 = vunpack.c.h.b16 %v1614
    %v1700 = vunpack.c.l.b16 %v1615
    %v1701 = vunpack.c.h.b16 %v1615
    %v1702 = vunpack.c.l.b16 %v1616
    %v1703 = vunpack.c.h.b16 %v1616
    %v1704 = vunpack.c.l.b16 %v1617
    %v1705 = vunpack.c.h.b16 %v1617
    %v1706 = vunpack.c.l.b16 %v1618
    %v1707 = vunpack.c.h.b16 %v1618
    %v1708 = vunpack.c.l.b16 %v1619
    %v1709 = vunpack.c.h.b16 %v1619
    %v1710 = vunpack.c.l.b16 %v1620
    %v1711 = vunpack.c.h.b16 %v1620
    %v1712 = vunpack.c.l.b16 %v1621
    %v1713 = vunpack.c.h.b16 %v1621
    %v1714 = vunpack.c.l.b16 %v1622
    %v1715 = vunpack.c.h.b16 %v1622
    %v1716 = vunpack.c.l.b16 %v1623
    %v1717 = vunpack.c.h.b16 %v1623
    %v1718 = vunpack.c.l.b16 %v1624
    %v1719 = vunpack.c.h.b16 %v1624
    %v1720 = vunpack.c.l.b16 %v1625
    %v1721 = vunpack.c.h.b16 %v1625
    %v1722 = vpack.c.b16 %v1660, %v1658
    %v1723 = vpack.c.b16 %v1661, %v1659
    %v1724 = vpack.c.b16 %v1664, %v1662
    %v1725 = vpack.c.b16 %v1665, %v1663
    %v1726 = vpack.c.b16 %v1668, %v1666
    %v1727 = vpack.c.b16 %v1669, %v1667
    %v1728 = vpack.c.b16 %v1672, %v1670
    %v1729 = vpack.c.b16 %v1673, %v1671
    %v1730 = vpack.c.b16 %v1676, %v1674
    %v1731 = vpack.c.b16 %v1677, %v1675
    %v1732 = vpack.c.b16 %v1680, %v1678
    %v1733 = vpack.c.b16 %v1681, %v1679
    %v1734 = vpack.c.b16 %v1684, %v1682
    %v1735 = vpack.c.b16 %v1685, %v1683
    %v1736 = vpack.c.b16 %v1688, %v1686
    %v1737 = vpack.c.b16 %v1689, %v1687
    %v1738 = vpack.c.b16 %v1692, %v1690
    %v1739 = vpack.c.b16 %v1693, %v1691
    %v1740 = vpack.c.b16 %v1696, %v1694
    %v1741 = vpack.c.b16 %v1697, %v1695
    %v1742 = vpack.c.b16 %v1700, %v1698
    %v1743 = vpack.c.b16 %v1701, %v1699
    %v1744 = vpack.c.b16 %v1704, %v1702
    %v1745 = vpack.c.b16 %v1705, %v1703
    %v1746 = vpack.c.b16 %v1708, %v1706
    %v1747 = vpack.c.b16 %v1709, %v1707
    %v1748 = vpack.c.b16 %v1712, %v1710
    %v1749 = vpack.c.b16 %v1713, %v1711
    %v1750 = vpack.c.b16 %v1716, %v1714
    %v1751 = vpack.c.b16 %v1717, %v1715
    %v1752 = vpack.c.b16 %v1720, %v1718
    %v1753 = vpack.c.b16 %v1721, %v1719
    %1786 = vmatprep.subr.bf16.mxu0 %v1723
    %1787 = vmatpush1.bf16.msra.mxu0 %v1722
    %1788 = vmatprep.subr.bf16.mxu0 %v1725
    %1789 = vmatpush1.bf16.msra.mxu0 %v1724
    %1790 = vmatprep.subr.bf16.mxu0 %v1727
    %1791 = vmatpush1.bf16.msra.mxu0 %v1726
    %1792 = vmatprep.subr.bf16.mxu0 %v1729
    %1793 = vmatpush1.bf16.msra.mxu0 %v1728
    %1794 = vmatprep.subr.bf16.mxu0 %v1731
    %1795 = vmatpush1.bf16.msra.mxu0 %v1730
    %1796 = vmatprep.subr.bf16.mxu0 %v1733
    %1797 = vmatpush1.bf16.msra.mxu0 %v1732
    %1798 = vmatprep.subr.bf16.mxu0 %v1735
    %1799 = vmatpush1.bf16.msra.mxu0 %v1734
    %1800 = vmatprep.subr.bf16.mxu0 %v1737
    %1801 = vmatpush1.bf16.msra.mxu0 %v1736
    %1802 = vmatprep.subr.bf16.mxu0 %v1739
    %1803 = vmatpush1.bf16.msra.mxu0 %v1738
    %1804 = vmatprep.subr.bf16.mxu0 %v1741
    %1805 = vmatpush1.bf16.msra.mxu0 %v1740
    %1806 = vmatprep.subr.bf16.mxu0 %v1743
    %1807 = vmatpush1.bf16.msra.mxu0 %v1742
    %1808 = vmatprep.subr.bf16.mxu0 %v1745
    %1809 = vmatpush1.bf16.msra.mxu0 %v1744
    %1810 = vmatprep.subr.bf16.mxu0 %v1747
    %1811 = vmatpush1.bf16.msra.mxu0 %v1746
    %1812 = vmatprep.subr.bf16.mxu0 %v1749
    %1813 = vmatpush1.bf16.msra.mxu0 %v1748
    %1814 = vmatprep.subr.bf16.mxu0 %v1751
    %1815 = vmatpush1.bf16.msra.mxu0 %v1750
    %1816 = vmatprep.subr.bf16.mxu0 %v1753
    %1817 = vmatpush1.bf16.msra.mxu0 %v1752
    %1818 = vmatprep.mubr.bf16.mxu0 %v1593
    %1819 = vmatmul.mubr.bf16.gmra.mrb[0].mxu0 %v1592
    %v1820 = vpop.f32.mrb[0].mxu0
    %v1821 = vadd.f32 0.0, %v1820
    %v1822 = vpop.f32.mrb[0].mxu0
    %v1823 = vadd.f32 0.0, %v1822
    %v1824 = vpop.f32.mrb[0].mxu0
    %v1825 = vadd.f32 0.0, %v1824
    %v1826 = vpop.f32.mrb[0].mxu0
    %v1827 = vadd.f32 0.0, %v1826
    %1828 = vdwg.mxu0
    %v1829 = vadd.f32 %v1335, %v1821
    %v1830 = vadd.f32 %v1336, %v1823
    %v1831 = vadd.f32 %v1337, %v1825
    %v1832 = vadd.f32 %v1338, %v1827
    %v1833 = vld [vmem:[%s11] sm:$0x3]
    %v1835 = vlaneseq
    %v1836 = vshrl.u32 %v1835, 7
    %v1837 = vsub.s32 0, %v1836
    %v1838 = vrot.slane %v1833, %v1837
    %v1839 = vlaneseq
    %v1840 = vshrl.u32 %v1839, 7
    %v1841 = vsub.s32 1, %v1840
    %v1842 = vrot.slane %v1833, %v1841
    %v1845 = vadd.f32 %v1829, %v1838
    %v1846 = vadd.f32 %v1830, %v1842
    %v1847 = vadd.f32 %v1831, %v1838
    %v1848 = vadd.f32 %v1832, %v1842
    %1849 = vst [vmem:[#allocation14] sm:$0xff] %v1845
    %1850 = vst [vmem:[#allocation14 + $0x8] sm:$0xff] %v1846
    %1851 = vst [vmem:[#allocation14 + $0x10] sm:$0xff] %v1847
    %1852 = vst [vmem:[#allocation14 + $0x18] sm:$0xff] %v1848
    // Predicated region
    $region86: #{dec_layer_forward.1} parent=1 // pred_check
      _
    $region87: #{dec_layer_forward.1} parent=1 // pred_check_branch
      %1854 = sbr.rel (0) target = $region89
    $region88: #{dec_layer_forward.1} parent=1 // pred_region
      %s1856 = ssub.s32 512, 512
      %1857 = vsyncadd [#allocation4], %s1856
      %s1858 = sshll.u32 [#allocation14], 4
      %s1859 = int_to_ptr.vmem [resolvable:$true] %s1858
      %1864 = dma.vmem_to_hbm [thread:$0]  %s1859, 512, %s14, [#allocation4], 256, 256, 16
    $region89: #{dec_layer_forward.1} parent=1 // pred_fallthru
      _
    // Predicated region
    $region90: #{dec_layer_forward.1} parent=1 // pred_check
      _
    $region91: #{dec_layer_forward.1} parent=1 // pred_check_branch
      %1866 = sbr.rel (0) target = $region93
    $region92: #{dec_layer_forward.1} parent=1 // pred_region
      %1867 = dma.done [#allocation4], 512
    $region93: #{dec_layer_forward.1} parent=1 // pred_fallthru
      _
    %1868 = vsyncpa [#allocation3], 1
    %1869 = vsyncpa [#allocation6], 1
    %1870 = vsyncpa [#allocation9], 1
    %1871 = vsyncpa [#allocation12], 1
    %1872 = vsyncpa [#allocation4], 1

</llo_original>
